<compile_context>
chip_gen: v5e
topology: v5e:2x2
jax: 0.10.0
libtpu: 0.0.40
codegen_flags: <defaults>
</compile_context>

<pallas_src>
import functools
import math

import numpy as np
import jax
import jax.numpy as jnp
from jax import lax
from jax.experimental import pallas as pl
from jax.experimental.pallas import tpu as pltpu

NUM_NODES = 64       # stand-in for 3976
HIDDEN = 32
OUTPUT = 16
REL_NUM = 4
NUM_EDGES = 96
OUT_PAD = 128        # lane-dense output width (wrapper slices back to OUTPUT)
LN_EPS = 1e-5        # nn.LayerNorm default
SOFTMAX_EPS = 1e-16  # torch_geometric softmax eps


def _layer_norm(x, gamma, beta):
    mu = jnp.mean(x, axis=-1, keepdims=True)
    var = jnp.mean((x - mu) ** 2, axis=-1, keepdims=True)
    return (x - mu) * lax.rsqrt(var + LN_EPS) * gamma + beta


# ----------------------------- fused kernel ----------------------------------
def fused_dan_kernel(hidden, out_dim, rel_num,
                     cr_ref, dinv_ref, row_1e_ref, col_e1_ref, et_ref,
                     wc_ref, bc_ref, g1_ref, b1_ref,
                     wrel_ref, wo_ref, bo_ref, g2_ref, b2_ref,
                     out_ref):
    H = hidden
    N = cr_ref.shape[0]
    E = col_e1_ref.shape[0]
    f32 = jnp.float32
    bf16 = jnp.bfloat16

    # --- gather one-hot (E,N), built in-register, bf16 MXU operand -----------
    iota_en = lax.broadcasted_iota(jnp.int32, (E, N), 1)
    m_col = (col_e1_ref[...] == iota_en).astype(bf16)          # gather by col

    # --- fused W_input + proj_gcn pre-activation (one HxH*2 matmul) ----------
    xcat = jnp.dot(cr_ref[...], wc_ref[...],
                   preferred_element_type=f32) + bc_ref[...]            # (N,2H)
    x = xcat[:, :H]                                                     # W_input(cr)
    gcn = _layer_norm(jnp.maximum(xcat[:, H:], 0.0),
                      g1_ref[...], b1_ref[...])                         # (N,H)

    # --- single gather matmul yields x_j AND dinv[col] ------------------------
    dinv_n = dinv_ref[...]                                              # (N,1)
    x_aug = jnp.concatenate([x, dinv_n], axis=1)                        # (N,H+1)
    gath = jnp.dot(m_col, x_aug.astype(bf16),
                   preferred_element_type=f32)                          # (E,H+1)
    x_j = gath[:, :H]
    dinv_col = gath[:, H:H + 1]                                         # (E,1)

    # --- relation matmul: one lane-packed (E,H)@(H,R*H) pass + select --------
    res_all = jnp.dot(x_j, wrel_ref[...], preferred_element_type=f32)   # (E,R*H)
    et = et_ref[...]                                                     # (E,1)
    res = jnp.zeros((E, H), f32)
    for r in range(rel_num):                 # out-of-range edge_type -> zeros
        res = res + jnp.where(et == r, res_all[:, r * H:(r + 1) * H], 0.0)

    # --- segment softmax pieces ------------------------------------------------
    # TODO(synk): global per-feature max (softmax is shift-invariant; only the
    # 1e-16 eps term deviates).  Switch to an online per-row running max kept
    # next to the (N,H) accumulators once this kernel is edge-tiled for the
    # real N=3976 module size.
    m = jnp.max(res, axis=0, keepdims=True)                              # (1,H)
    ex = jnp.exp(res - m)                                                # (E,H)

    # --- ONE fused scatter matmul: [x_j*dinv_col | ex | res*ex] --------------
    iota_ne = lax.broadcasted_iota(jnp.int32, (N, E), 0)
    m_rowT = (row_1e_ref[...] == iota_ne).astype(bf16)                   # (N,E)
    rhs = jnp.concatenate([x_j * dinv_col, ex, res * ex], axis=1)        # (E,3H)
    scat = jnp.dot(m_rowT, rhs.astype(bf16),
                   preferred_element_type=f32)                           # (N,3H)

    msg_gcn = gcn + dinv_n * scat[:, :H]          # dinv[row] factored out
    denom = scat[:, H:2 * H]
    numer = scat[:, 2 * H:3 * H]
    msg = numer * pl.reciprocal(denom + SOFTMAX_EPS, approx=True)
    comb = msg_gcn + 0.1 * jnp.maximum(msg, 0.0)                         # (N,H)

    # --- contagion_out + LayerNorm, lane-dense into an O-padded block --------
    y = jnp.dot(comb, wo_ref[...], preferred_element_type=f32) + bo_ref[...]
    lane = lax.broadcasted_iota(jnp.int32, y.shape, 1)
    valid = lane < out_dim                    # padded cols of y are exactly 0
    mu = jnp.sum(y, axis=-1, keepdims=True) / out_dim
    centered = jnp.where(valid, y - mu, 0.0)
    var = jnp.sum(centered * centered, axis=-1, keepdims=True) / out_dim
    out_ref[...] = centered * lax.rsqrt(var + LN_EPS) * g2_ref[...] + b2_ref[...]


def _fs(shape):
    """Full-array BlockSpec (block == whole array) for a grid of size 1."""
    return pl.BlockSpec(shape, lambda i: (0,) * len(shape))


def dan_forward(contagion_risk, edge_index, edge_type, edge_weight, p):
    # Only the edge_weight == None branch is implementable (the other branch
    # uses self.norm_weight which is None in the PyTorch module).
    assert edge_weight is None
    N, H = contagion_risk.shape
    E = edge_index.shape[1]
    O = p["W_out"].shape[0]
    R = p["W_rel"].shape[0]
    OPAD = OUT_PAD

    row = edge_index[0].astype(jnp.int32)
    col = edge_index[1].astype(jnp.int32)
    et = edge_type.astype(jnp.int32)

    # ---- wrapper-side gcn_norm degrees (removes in-kernel degree reductions
    # and the global dependency that would force a two-pass edge-tiled kernel).
    deg = jax.ops.segment_sum(jnp.ones((E,), jnp.float32), col, num_segments=N)
    dinv = jnp.where(deg > 0, lax.rsqrt(jnp.maximum(deg, 1e-12)), 0.0)[:, None]

    # ---- parameter prep (pure weight-side folding; could be precomputed) ----
    WiT = p["W_input"].T                                   # (H,H)  y = x @ W^T
    WpT = p["W_proj"].T
    Wc = jnp.concatenate([WiT, WiT @ WpT], axis=1)         # (H,2H)
    bc = jnp.concatenate(
        [p["b_input"], p["b_input"] @ WpT + p["b_proj"]])[None, :]      # (1,2H)
    Wrel_packed = jnp.transpose(p["W_rel"], (1, 0, 2)).reshape(H, R * H)
    WoT_pad = jnp.pad(p["W_out"].T, ((0, 0), (0, OPAD - O)))            # (H,OPAD)
    bo_pad = jnp.pad(p["b_out"], (0, OPAD - O))[None, :]
    g2_pad = jnp.pad(p["gamma_out"], (0, OPAD - O))[None, :]
    b2_pad = jnp.pad(p["beta_out"], (0, OPAD - O))[None, :]

    kernel = functools.partial(fused_dan_kernel, H, O, R)

    # TODO(synk): at the real module size (N=3976, large E) this single-block
    # kernel should be edge-tiled: grid over E ("arbitrary", innermost) with
    # per-tile index-vector DMAs, resident (N,H) msg_gcn/numer/denom scratch
    # accumulators initialized/finalized via pl.when, an online per-row softmax
    # max, explicit vmem_limit_bytes, and a "parallel" node-block axis so v7x's
    # second TensorCore is used.
    out_pad = pl.pallas_call(
        kernel,
        out_shape=jax.ShapeDtypeStruct((N, OPAD), jnp.float32),
        grid=(1,),
        in_specs=[_fs((N, H)), _fs((N, 1)),
                  _fs((1, E)), _fs((E, 1)), _fs((E, 1)),
                  _fs((H, 2 * H)), _fs((1, 2 * H)), _fs((1, H)), _fs((1, H)),
                  _fs((H, R * H)),
                  _fs((H, OPAD)), _fs((1, OPAD)), _fs((1, OPAD)), _fs((1, OPAD))],
        out_specs=_fs((N, OPAD)),
        compiler_params=pltpu.CompilerParams(
            dimension_semantics=("arbitrary",)),
    )(contagion_risk, dinv,
      row[None, :], col[:, None], et[:, None],
      Wc, bc, p["gamma_gcn"][None, :], p["beta_gcn"][None, :],
      Wrel_packed,
      WoT_pad, bo_pad, g2_pad, b2_pad)

    return out_pad[:, :O]


# ----------------------------- pure-JAX reference -----------------------------
def dan_reference(contagion_risk, edge_index, edge_type, p):
    """Pure-JAX reference mirroring the PyTorch semantics."""
    row, col = edge_index[0], edge_index[1]
    N, _ = contagion_risk.shape
    E = row.shape[0]
    x = contagion_risk @ p["W_input"].T + p["b_input"]
    x_j = x[col]
    deg = jax.ops.segment_sum(jnp.ones((E,), jnp.float32), col, num_segments=N)
    dinv = jnp.where(deg > 0, 1.0 / jnp.sqrt(jnp.maximum(deg, 1e-12)), 0.0)
    nw = (dinv[row] * dinv[col])[:, None]
    h = jax.nn.relu(x @ p["W_proj"].T + p["b_proj"])
    gcn = _layer_norm(h, p["gamma_gcn"], p["beta_gcn"])
    msg_gcn = gcn + jax.ops.segment_sum(x_j * nw, row, num_segments=N)
    res = jnp.einsum("eh,ehk->ek", x_j, p["W_rel"][edge_type])
    gmax = jax.ops.segment_max(res, row, num_segments=N)[row]
    ex = jnp.exp(res - gmax)
    denom = jax.ops.segment_sum(ex, row, num_segments=N)[row] + SOFTMAX_EPS
    msg = jax.ops.segment_sum(res * (ex / denom), row, num_segments=N)
    y = (msg_gcn + 0.1 * jax.nn.relu(msg)) @ p["W_out"].T + p["b_out"]
    return _layer_norm(y, p["gamma_out"], p["beta_out"])


def make_params(key):
    ks = jax.random.split(key, 7)

    def uinit(k, shape, fan_in):
        bound = 1.0 / math.sqrt(fan_in)  # kaiming_uniform(a=sqrt(5)) == U(-1/sqrt(fan_in), +)
        return jax.random.uniform(k, shape, jnp.float32, -bound, bound)

    return {
        "W_input": uinit(ks[0], (HIDDEN, HIDDEN), HIDDEN),
        "b_input": uinit(ks[1], (HIDDEN,), HIDDEN),
        "W_proj": uinit(ks[2], (HIDDEN, HIDDEN), HIDDEN),
        "b_proj": uinit(ks[3], (HIDDEN,), HIDDEN),
        "W_rel": uinit(ks[4], (REL_NUM, HIDDEN, HIDDEN), HIDDEN),
        "W_out": uinit(ks[5], (OUTPUT, HIDDEN), HIDDEN),
        "b_out": uinit(ks[6], (OUTPUT,), HIDDEN),
        "gamma_gcn": jnp.ones((HIDDEN,), jnp.float32),
        "beta_gcn": jnp.zeros((HIDDEN,), jnp.float32),
        "gamma_out": jnp.ones((OUTPUT,), jnp.float32),
        "beta_out": jnp.zeros((OUTPUT,), jnp.float32),
    }


if __name__ == "__main__":
    key = jax.random.PRNGKey(0)
    kp, k1, k2, k3, k4 = jax.random.split(key, 5)
    params = make_params(kp)

    contagion_risk = jax.random.normal(k1, (NUM_NODES, HIDDEN), jnp.float32)
    row = jax.random.randint(k2, (NUM_EDGES,), 0, NUM_NODES, dtype=jnp.int32)
    col = jax.random.randint(k3, (NUM_EDGES,), 0, NUM_NODES, dtype=jnp.int32)
    edge_index = jnp.stack([row, col], axis=0)                      # [2, E]
    edge_type = jax.random.randint(k4, (NUM_EDGES,), 0, REL_NUM, dtype=jnp.int32)
    edge_weight = None   # only valid branch of the PyTorch forward

    out = dan_forward(contagion_risk, edge_index, edge_type, edge_weight, params)
    out = jax.block_until_ready(out)

    ref = dan_reference(contagion_risk, edge_index, edge_type, params)
    np.testing.assert_allclose(np.asarray(out), np.asarray(ref),
                               rtol=1e-2, atol=1e-2)
    print("KERNEL_OK")
</pallas_src>

<mosaic_0001>
module attributes {stable_mosaic.version = 11 : i64} {
  func.func @fused_dan_kernel(%arg0: i32, %arg1: memref<64x32xf32, #tpu.memory_space<vmem>>, %arg2: memref<64x1xf32, #tpu.memory_space<vmem>>, %arg3: memref<1x96xi32, #tpu.memory_space<vmem>>, %arg4: memref<96x1xi32, #tpu.memory_space<vmem>>, %arg5: memref<96x1xi32, #tpu.memory_space<vmem>>, %arg6: memref<32x64xf32, #tpu.memory_space<vmem>>, %arg7: memref<1x64xf32, #tpu.memory_space<vmem>>, %arg8: memref<1x32xf32, #tpu.memory_space<vmem>>, %arg9: memref<1x32xf32, #tpu.memory_space<vmem>>, %arg10: memref<32x128xf32, #tpu.memory_space<vmem>>, %arg11: memref<32x128xf32, #tpu.memory_space<vmem>>, %arg12: memref<1x128xf32, #tpu.memory_space<vmem>>, %arg13: memref<1x128xf32, #tpu.memory_space<vmem>>, %arg14: memref<1x128xf32, #tpu.memory_space<vmem>>, %arg15: memref<64x128xf32, #tpu.memory_space<vmem>>) attributes {dimension_semantics = [#tpu.dimension_semantics<arbitrary>], iteration_bounds = array<i64: 1>, scalar_prefetch = 0 : i64, scratch_operands = 0 : i64, tpu.core_type = #tpu.core_type<tc>, window_params = [{pipeline_mode = #tpu.pipeline_mode<synchronous>, transform_indices = @transform_0, window_bounds = array<i64: 64, 32>}, {pipeline_mode = #tpu.pipeline_mode<synchronous>, transform_indices = @transform_1, window_bounds = array<i64: 64, 1>}, {pipeline_mode = #tpu.pipeline_mode<synchronous>, transform_indices = @transform_2, window_bounds = array<i64: 1, 96>}, {pipeline_mode = #tpu.pipeline_mode<synchronous>, transform_indices = @transform_3, window_bounds = array<i64: 96, 1>}, {pipeline_mode = #tpu.pipeline_mode<synchronous>, transform_indices = @transform_4, window_bounds = array<i64: 96, 1>}, {pipeline_mode = #tpu.pipeline_mode<synchronous>, transform_indices = @transform_5, window_bounds = array<i64: 32, 64>}, {pipeline_mode = #tpu.pipeline_mode<synchronous>, transform_indices = @transform_6, window_bounds = array<i64: 1, 64>}, {pipeline_mode = #tpu.pipeline_mode<synchronous>, transform_indices = @transform_7, window_bounds = array<i64: 1, 32>}, {pipeline_mode = #tpu.pipeline_mode<synchronous>, transform_indices = @transform_8, window_bounds = array<i64: 1, 32>}, {pipeline_mode = #tpu.pipeline_mode<synchronous>, transform_indices = @transform_9, window_bounds = array<i64: 32, 128>}, {pipeline_mode = #tpu.pipeline_mode<synchronous>, transform_indices = @transform_10, window_bounds = array<i64: 32, 128>}, {pipeline_mode = #tpu.pipeline_mode<synchronous>, transform_indices = @transform_11, window_bounds = array<i64: 1, 128>}, {pipeline_mode = #tpu.pipeline_mode<synchronous>, transform_indices = @transform_12, window_bounds = array<i64: 1, 128>}, {pipeline_mode = #tpu.pipeline_mode<synchronous>, transform_indices = @transform_13, window_bounds = array<i64: 1, 128>}, {pipeline_mode = #tpu.pipeline_mode<synchronous>, transform_indices = @transform_14, window_bounds = array<i64: 64, 128>}]} {
    %0 = tpu.iota {dimensions = array<i32: 1>} : vector<96x64xi32>
    %c0 = arith.constant 0 : index
    %c0_0 = arith.constant 0 : index
    %1 = vector.load %arg4[%c0, %c0_0] : memref<96x1xi32, #tpu.memory_space<vmem>>, vector<96x1xi32>
    %2 = vector.broadcast %1 : vector<96x1xi32> to vector<96x64xi32>
    %3 = arith.cmpi eq, %2, %0 : vector<96x64xi32>
    %4 = arith.extui %3 : vector<96x64xi1> to vector<96x64xi32>
    %5 = arith.sitofp %4 : vector<96x64xi32> to vector<96x64xf32>
    %6 = arith.truncf %5 : vector<96x64xf32> to vector<96x64xbf16>
    %c0_1 = arith.constant 0 : index
    %c0_2 = arith.constant 0 : index
    %7 = vector.load %arg1[%c0_1, %c0_2] : memref<64x32xf32, #tpu.memory_space<vmem>>, vector<64x32xf32>
    %c0_3 = arith.constant 0 : index
    %c0_4 = arith.constant 0 : index
    %8 = vector.load %arg6[%c0_3, %c0_4] : memref<32x64xf32, #tpu.memory_space<vmem>>, vector<32x64xf32>
    %cst = arith.constant dense<0.000000e+00> : vector<64x64xf32>
    %9 = tpu.matmul %7, %8, %cst {dimension_numbers = #tpu.dot_dimension_numbers<[1], [0], [0], [1], [0, 0, 1, 1], [], []>} : vector<64x32xf32>, vector<32x64xf32>, vector<64x64xf32> -> vector<64x64xf32>
    %c0_5 = arith.constant 0 : index
    %c0_6 = arith.constant 0 : index
    %10 = vector.load %arg7[%c0_5, %c0_6] : memref<1x64xf32, #tpu.memory_space<vmem>>, vector<1x64xf32>
    %11 = vector.broadcast %10 : vector<1x64xf32> to vector<64x64xf32>
    %12 = arith.addf %9, %11 : vector<64x64xf32>
    %13 = vector.extract_strided_slice %12 {offsets = [0, 0], sizes = [64, 32], strides = [1, 1]} : vector<64x64xf32> to vector<64x32xf32>
    %14 = vector.extract_strided_slice %12 {offsets = [0, 32], sizes = [64, 32], strides = [1, 1]} : vector<64x64xf32> to vector<64x32xf32>
    %cst_7 = arith.constant 0.000000e+00 : f32
    %15 = vector.broadcast %cst_7 : f32 to vector<64x32xf32>
    %16 = arith.maximumf %14, %15 : vector<64x32xf32>
    %c0_8 = arith.constant 0 : index
    %c0_9 = arith.constant 0 : index
    %17 = vector.load %arg8[%c0_8, %c0_9] : memref<1x32xf32, #tpu.memory_space<vmem>>, vector<1x32xf32>
    %c0_10 = arith.constant 0 : index
    %c0_11 = arith.constant 0 : index
    %18 = vector.load %arg9[%c0_10, %c0_11] : memref<1x32xf32, #tpu.memory_space<vmem>>, vector<1x32xf32>
    %cst_12 = arith.constant dense<0.000000e+00> : vector<64xf32>
    %19 = vector.multi_reduction <add>, %16, %cst_12 [1] : vector<64x32xf32> to vector<64xf32>
    %20 = vector.shape_cast %19 : vector<64xf32> to vector<64x1xf32>
    %cst_13 = arith.constant 3.200000e+01 : f32
    %21 = vector.broadcast %cst_13 : f32 to vector<64x1xf32>
    %22 = arith.divf %20, %21 : vector<64x1xf32>
    %23 = vector.broadcast %22 : vector<64x1xf32> to vector<64x32xf32>
    %24 = arith.subf %16, %23 : vector<64x32xf32>
    %25 = arith.mulf %24, %24 : vector<64x32xf32>
    %cst_14 = arith.constant dense<0.000000e+00> : vector<64xf32>
    %26 = vector.multi_reduction <add>, %25, %cst_14 [1] : vector<64x32xf32> to vector<64xf32>
    %27 = vector.shape_cast %26 : vector<64xf32> to vector<64x1xf32>
    %cst_15 = arith.constant 3.200000e+01 : f32
    %28 = vector.broadcast %cst_15 : f32 to vector<64x1xf32>
    %29 = arith.divf %27, %28 : vector<64x1xf32>
    %30 = vector.broadcast %22 : vector<64x1xf32> to vector<64x32xf32>
    %31 = arith.subf %16, %30 : vector<64x32xf32>
    %cst_16 = arith.constant 9.99999974E-6 : f32
    %32 = vector.broadcast %cst_16 : f32 to vector<64x1xf32>
    %33 = arith.addf %29, %32 : vector<64x1xf32>
    %34 = math.rsqrt %33 : vector<64x1xf32>
    %35 = vector.broadcast %34 : vector<64x1xf32> to vector<64x32xf32>
    %36 = arith.mulf %31, %35 : vector<64x32xf32>
    %37 = vector.broadcast %17 : vector<1x32xf32> to vector<64x32xf32>
    %38 = arith.mulf %36, %37 : vector<64x32xf32>
    %39 = vector.broadcast %18 : vector<1x32xf32> to vector<64x32xf32>
    %40 = arith.addf %38, %39 : vector<64x32xf32>
    %c0_17 = arith.constant 0 : index
    %c0_18 = arith.constant 0 : index
    %41 = vector.load %arg2[%c0_17, %c0_18] : memref<64x1xf32, #tpu.memory_space<vmem>>, vector<64x1xf32>
    %42 = tpu.concatenate %13, %41 in 1 : vector<64x32xf32>, vector<64x1xf32> -> vector<64x33xf32>
    %43 = arith.truncf %42 : vector<64x33xf32> to vector<64x33xbf16>
    %cst_19 = arith.constant dense<0.000000e+00> : vector<96x33xf32>
    %44 = tpu.matmul %6, %43, %cst_19 {dimension_numbers = #tpu.dot_dimension_numbers<[1], [0], [0], [1], [0, 0, 1, 1], [], []>} : vector<96x64xbf16>, vector<64x33xbf16>, vector<96x33xf32> -> vector<96x33xf32>
    %45 = vector.extract_strided_slice %44 {offsets = [0, 0], sizes = [96, 32], strides = [1, 1]} : vector<96x33xf32> to vector<96x32xf32>
    %46 = vector.extract_strided_slice %44 {offsets = [0, 32], sizes = [96, 1], strides = [1, 1]} : vector<96x33xf32> to vector<96x1xf32>
    %c0_20 = arith.constant 0 : index
    %c0_21 = arith.constant 0 : index
    %47 = vector.load %arg10[%c0_20, %c0_21] : memref<32x128xf32, #tpu.memory_space<vmem>>, vector<32x128xf32>
    %cst_22 = arith.constant dense<0.000000e+00> : vector<96x128xf32>
    %48 = tpu.matmul %45, %47, %cst_22 {dimension_numbers = #tpu.dot_dimension_numbers<[1], [0], [0], [1], [0, 0, 1, 1], [], []>} : vector<96x32xf32>, vector<32x128xf32>, vector<96x128xf32> -> vector<96x128xf32>
    %c0_23 = arith.constant 0 : index
    %c0_24 = arith.constant 0 : index
    %49 = vector.load %arg5[%c0_23, %c0_24] : memref<96x1xi32, #tpu.memory_space<vmem>>, vector<96x1xi32>
    %cst_25 = arith.constant 0.000000e+00 : f32
    %50 = vector.broadcast %cst_25 : f32 to vector<96x32xf32>
    %c0_i32 = arith.constant 0 : i32
    %51 = vector.broadcast %c0_i32 : i32 to vector<96x1xi32>
    %52 = arith.cmpi eq, %49, %51 : vector<96x1xi32>
    %53 = vector.extract_strided_slice %48 {offsets = [0, 0], sizes = [96, 32], strides = [1, 1]} : vector<96x128xf32> to vector<96x32xf32>
    %cst_26 = arith.constant 0.000000e+00 : f32
    %54 = vector.shape_cast %52 : vector<96x1xi1> to vector<96x1xi1>
    %55 = vector.broadcast %54 : vector<96x1xi1> to vector<96x32xi1>
    %56 = vector.broadcast %cst_26 : f32 to vector<96x32xf32>
    %57 = arith.select %55, %53, %56 : vector<96x32xi1>, vector<96x32xf32>
    %58 = arith.addf %50, %57 : vector<96x32xf32>
    %c1_i32 = arith.constant 1 : i32
    %59 = vector.broadcast %c1_i32 : i32 to vector<96x1xi32>
    %60 = arith.cmpi eq, %49, %59 : vector<96x1xi32>
    %61 = vector.extract_strided_slice %48 {offsets = [0, 32], sizes = [96, 32], strides = [1, 1]} : vector<96x128xf32> to vector<96x32xf32>
    %cst_27 = arith.constant 0.000000e+00 : f32
    %62 = vector.shape_cast %60 : vector<96x1xi1> to vector<96x1xi1>
    %63 = vector.broadcast %62 : vector<96x1xi1> to vector<96x32xi1>
    %64 = vector.broadcast %cst_27 : f32 to vector<96x32xf32>
    %65 = arith.select %63, %61, %64 : vector<96x32xi1>, vector<96x32xf32>
    %66 = arith.addf %58, %65 : vector<96x32xf32>
    %c2_i32 = arith.constant 2 : i32
    %67 = vector.broadcast %c2_i32 : i32 to vector<96x1xi32>
    %68 = arith.cmpi eq, %49, %67 : vector<96x1xi32>
    %69 = vector.extract_strided_slice %48 {offsets = [0, 64], sizes = [96, 32], strides = [1, 1]} : vector<96x128xf32> to vector<96x32xf32>
    %cst_28 = arith.constant 0.000000e+00 : f32
    %70 = vector.shape_cast %68 : vector<96x1xi1> to vector<96x1xi1>
    %71 = vector.broadcast %70 : vector<96x1xi1> to vector<96x32xi1>
    %72 = vector.broadcast %cst_28 : f32 to vector<96x32xf32>
    %73 = arith.select %71, %69, %72 : vector<96x32xi1>, vector<96x32xf32>
    %74 = arith.addf %66, %73 : vector<96x32xf32>
    %c3_i32 = arith.constant 3 : i32
    %75 = vector.broadcast %c3_i32 : i32 to vector<96x1xi32>
    %76 = arith.cmpi eq, %49, %75 : vector<96x1xi32>
    %77 = vector.extract_strided_slice %48 {offsets = [0, 96], sizes = [96, 32], strides = [1, 1]} : vector<96x128xf32> to vector<96x32xf32>
    %cst_29 = arith.constant 0.000000e+00 : f32
    %78 = vector.shape_cast %76 : vector<96x1xi1> to vector<96x1xi1>
    %79 = vector.broadcast %78 : vector<96x1xi1> to vector<96x32xi1>
    %80 = vector.broadcast %cst_29 : f32 to vector<96x32xf32>
    %81 = arith.select %79, %77, %80 : vector<96x32xi1>, vector<96x32xf32>
    %82 = arith.addf %74, %81 : vector<96x32xf32>
    %cst_30 = arith.constant dense<0xFF800000> : vector<32xf32>
    %83 = vector.multi_reduction <maximumf>, %82, %cst_30 [0] : vector<96x32xf32> to vector<32xf32>
    %84 = vector.shape_cast %83 : vector<32xf32> to vector<1x32xf32>
    %85 = vector.broadcast %84 : vector<1x32xf32> to vector<96x32xf32>
    %86 = arith.subf %82, %85 : vector<96x32xf32>
    %87 = math.exp %86 : vector<96x32xf32>
    %88 = tpu.iota {dimensions = array<i32: 0>} : vector<64x96xi32>
    %c0_31 = arith.constant 0 : index
    %c0_32 = arith.constant 0 : index
    %89 = vector.load %arg3[%c0_31, %c0_32] : memref<1x96xi32, #tpu.memory_space<vmem>>, vector<1x96xi32>
    %90 = vector.broadcast %89 : vector<1x96xi32> to vector<64x96xi32>
    %91 = arith.cmpi eq, %90, %88 : vector<64x96xi32>
    %92 = arith.extui %91 : vector<64x96xi1> to vector<64x96xi32>
    %93 = arith.sitofp %92 : vector<64x96xi32> to vector<64x96xf32>
    %94 = arith.truncf %93 : vector<64x96xf32> to vector<64x96xbf16>
    %95 = vector.broadcast %46 : vector<96x1xf32> to vector<96x32xf32>
    %96 = arith.mulf %45, %95 : vector<96x32xf32>
    %97 = arith.mulf %82, %87 : vector<96x32xf32>
    %98 = tpu.concatenate %96, %87, %97 in 1 : vector<96x32xf32>, vector<96x32xf32>, vector<96x32xf32> -> vector<96x96xf32>
    %99 = arith.truncf %98 : vector<96x96xf32> to vector<96x96xbf16>
    %cst_33 = arith.constant dense<0.000000e+00> : vector<64x96xf32>
    %100 = tpu.matmul %94, %99, %cst_33 {dimension_numbers = #tpu.dot_dimension_numbers<[1], [0], [0], [1], [0, 0, 1, 1], [], []>} : vector<64x96xbf16>, vector<96x96xbf16>, vector<64x96xf32> -> vector<64x96xf32>
    %101 = vector.extract_strided_slice %100 {offsets = [0, 0], sizes = [64, 32], strides = [1, 1]} : vector<64x96xf32> to vector<64x32xf32>
    %102 = vector.broadcast %41 : vector<64x1xf32> to vector<64x32xf32>
    %103 = arith.mulf %102, %101 : vector<64x32xf32>
    %104 = arith.addf %40, %103 : vector<64x32xf32>
    %105 = vector.extract_strided_slice %100 {offsets = [0, 32], sizes = [64, 32], strides = [1, 1]} : vector<64x96xf32> to vector<64x32xf32>
    %106 = vector.extract_strided_slice %100 {offsets = [0, 64], sizes = [64, 32], strides = [1, 1]} : vector<64x96xf32> to vector<64x32xf32>
    %cst_34 = arith.constant 1.000000e-16 : f32
    %107 = vector.broadcast %cst_34 : f32 to vector<64x32xf32>
    %108 = arith.addf %105, %107 : vector<64x32xf32>
    %109 = tpu.reciprocal %108 {approx = true} : vector<64x32xf32> -> vector<64x32xf32>
    %110 = arith.mulf %106, %109 : vector<64x32xf32>
    %cst_35 = arith.constant 0.000000e+00 : f32
    %111 = vector.broadcast %cst_35 : f32 to vector<64x32xf32>
    %112 = arith.maximumf %110, %111 : vector<64x32xf32>
    %cst_36 = arith.constant 1.000000e-01 : f32
    %113 = vector.broadcast %cst_36 : f32 to vector<64x32xf32>
    %114 = arith.mulf %113, %112 : vector<64x32xf32>
    %115 = arith.addf %104, %114 : vector<64x32xf32>
    %c0_37 = arith.constant 0 : index
    %c0_38 = arith.constant 0 : index
    %116 = vector.load %arg11[%c0_37, %c0_38] : memref<32x128xf32, #tpu.memory_space<vmem>>, vector<32x128xf32>
    %cst_39 = arith.constant dense<0.000000e+00> : vector<64x128xf32>
    %117 = tpu.matmul %115, %116, %cst_39 {dimension_numbers = #tpu.dot_dimension_numbers<[1], [0], [0], [1], [0, 0, 1, 1], [], []>} : vector<64x32xf32>, vector<32x128xf32>, vector<64x128xf32> -> vector<64x128xf32>
    %c0_40 = arith.constant 0 : index
    %c0_41 = arith.constant 0 : index
    %118 = vector.load %arg12[%c0_40, %c0_41] : memref<1x128xf32, #tpu.memory_space<vmem>>, vector<1x128xf32>
    %119 = vector.broadcast %118 : vector<1x128xf32> to vector<64x128xf32>
    %120 = arith.addf %117, %119 : vector<64x128xf32>
    %121 = tpu.iota {dimensions = array<i32: 1>} : vector<64x128xi32>
    %c16_i32 = arith.constant 16 : i32
    %122 = vector.broadcast %c16_i32 : i32 to vector<64x128xi32>
    %123 = arith.cmpi slt, %121, %122 : vector<64x128xi32>
    %cst_42 = arith.constant dense<0.000000e+00> : vector<64xf32>
    %124 = vector.multi_reduction <add>, %120, %cst_42 [1] : vector<64x128xf32> to vector<64xf32>
    %125 = vector.shape_cast %124 : vector<64xf32> to vector<64x1xf32>
    %cst_43 = arith.constant 1.600000e+01 : f32
    %126 = vector.broadcast %cst_43 : f32 to vector<64x1xf32>
    %127 = arith.divf %125, %126 : vector<64x1xf32>
    %128 = vector.broadcast %127 : vector<64x1xf32> to vector<64x128xf32>
    %129 = arith.subf %120, %128 : vector<64x128xf32>
    %cst_44 = arith.constant 0.000000e+00 : f32
    %130 = vector.broadcast %cst_44 : f32 to vector<64x128xf32>
    %131 = arith.select %123, %129, %130 : vector<64x128xi1>, vector<64x128xf32>
    %132 = arith.mulf %131, %131 : vector<64x128xf32>
    %cst_45 = arith.constant dense<0.000000e+00> : vector<64xf32>
    %133 = vector.multi_reduction <add>, %132, %cst_45 [1] : vector<64x128xf32> to vector<64xf32>
    %134 = vector.shape_cast %133 : vector<64xf32> to vector<64x1xf32>
    %cst_46 = arith.constant 1.600000e+01 : f32
    %135 = vector.broadcast %cst_46 : f32 to vector<64x1xf32>
    %136 = arith.divf %134, %135 : vector<64x1xf32>
    %cst_47 = arith.constant 9.99999974E-6 : f32
    %137 = vector.broadcast %cst_47 : f32 to vector<64x1xf32>
    %138 = arith.addf %136, %137 : vector<64x1xf32>
    %139 = math.rsqrt %138 : vector<64x1xf32>
    %140 = vector.broadcast %139 : vector<64x1xf32> to vector<64x128xf32>
    %141 = arith.mulf %131, %140 : vector<64x128xf32>
    %c0_48 = arith.constant 0 : index
    %c0_49 = arith.constant 0 : index
    %142 = vector.load %arg13[%c0_48, %c0_49] : memref<1x128xf32, #tpu.memory_space<vmem>>, vector<1x128xf32>
    %143 = vector.broadcast %142 : vector<1x128xf32> to vector<64x128xf32>
    %144 = arith.mulf %141, %143 : vector<64x128xf32>
    %c0_50 = arith.constant 0 : index
    %c0_51 = arith.constant 0 : index
    %145 = vector.load %arg14[%c0_50, %c0_51] : memref<1x128xf32, #tpu.memory_space<vmem>>, vector<1x128xf32>
    %146 = vector.broadcast %145 : vector<1x128xf32> to vector<64x128xf32>
    %147 = arith.addf %144, %146 : vector<64x128xf32>
    %c0_52 = arith.constant 0 : index
    %c0_53 = arith.constant 0 : index
    %148 = vector.load %arg15[%c0_52, %c0_53] : memref<64x128xf32, #tpu.memory_space<vmem>>, vector<64x128xf32>
    tpu.vector_store %arg15[%c0_52, %c0_53], %147 {strides = array<i32>} : memref<64x128xf32, #tpu.memory_space<vmem>>, vector<64x128xf32>,
    return
  }
  func.func @transform_0(%arg0: i32) -> (i32, i32) {
    %c0_i32 = arith.constant 0 : i32
    %c0_i32_0 = arith.constant 0 : i32
    %c0_i32_1 = arith.constant 0 : i32
    return %c0_i32, %c0_i32_0 : i32, i32
  }
  func.func @transform_1(%arg0: i32) -> (i32, i32) {
    %c0_i32 = arith.constant 0 : i32
    %c0_i32_0 = arith.constant 0 : i32
    %c0_i32_1 = arith.constant 0 : i32
    return %c0_i32, %c0_i32_0 : i32, i32
  }
  func.func @transform_2(%arg0: i32) -> (i32, i32) {
    %c0_i32 = arith.constant 0 : i32
    %c0_i32_0 = arith.constant 0 : i32
    %c0_i32_1 = arith.constant 0 : i32
    return %c0_i32, %c0_i32_0 : i32, i32
  }
  func.func @transform_3(%arg0: i32) -> (i32, i32) {
    %c0_i32 = arith.constant 0 : i32
    %c0_i32_0 = arith.constant 0 : i32
    %c0_i32_1 = arith.constant 0 : i32
    return %c0_i32, %c0_i32_0 : i32, i32
  }
  func.func @transform_4(%arg0: i32) -> (i32, i32) {
    %c0_i32 = arith.constant 0 : i32
    %c0_i32_0 = arith.constant 0 : i32
    %c0_i32_1 = arith.constant 0 : i32
    return %c0_i32, %c0_i32_0 : i32, i32
  }
  func.func @transform_5(%arg0: i32) -> (i32, i32) {
    %c0_i32 = arith.constant 0 : i32
    %c0_i32_0 = arith.constant 0 : i32
    %c0_i32_1 = arith.constant 0 : i32
    return %c0_i32, %c0_i32_0 : i32, i32
  }
  func.func @transform_6(%arg0: i32) -> (i32, i32) {
    %c0_i32 = arith.constant 0 : i32
    %c0_i32_0 = arith.constant 0 : i32
    %c0_i32_1 = arith.constant 0 : i32
    return %c0_i32, %c0_i32_0 : i32, i32
  }
  func.func @transform_7(%arg0: i32) -> (i32, i32) {
    %c0_i32 = arith.constant 0 : i32
    %c0_i32_0 = arith.constant 0 : i32
    %c0_i32_1 = arith.constant 0 : i32
    return %c0_i32, %c0_i32_0 : i32, i32
  }
  func.func @transform_8(%arg0: i32) -> (i32, i32) {
    %c0_i32 = arith.constant 0 : i32
    %c0_i32_0 = arith.constant 0 : i32
    %c0_i32_1 = arith.constant 0 : i32
    return %c0_i32, %c0_i32_0 : i32, i32
  }
  func.func @transform_9(%arg0: i32) -> (i32, i32) {
    %c0_i32 = arith.constant 0 : i32
    %c0_i32_0 = arith.constant 0 : i32
    %c0_i32_1 = arith.constant 0 : i32
    return %c0_i32, %c0_i32_0 : i32, i32
  }
  func.func @transform_10(%arg0: i32) -> (i32, i32) {
    %c0_i32 = arith.constant 0 : i32
    %c0_i32_0 = arith.constant 0 : i32
    %c0_i32_1 = arith.constant 0 : i32
    return %c0_i32, %c0_i32_0 : i32, i32
  }
  func.func @transform_11(%arg0: i32) -> (i32, i32) {
    %c0_i32 = arith.constant 0 : i32
    %c0_i32_0 = arith.constant 0 : i32
    %c0_i32_1 = arith.constant 0 : i32
    return %c0_i32, %c0_i32_0 : i32, i32
  }
  func.func @transform_12(%arg0: i32) -> (i32, i32) {
    %c0_i32 = arith.constant 0 : i32
    %c0_i32_0 = arith.constant 0 : i32
    %c0_i32_1 = arith.constant 0 : i32
    return %c0_i32, %c0_i32_0 : i32, i32
  }
  func.func @transform_13(%arg0: i32) -> (i32, i32) {
    %c0_i32 = arith.constant 0 : i32
    %c0_i32_0 = arith.constant 0 : i32
    %c0_i32_1 = arith.constant 0 : i32
    return %c0_i32, %c0_i32_0 : i32, i32
  }
  func.func @transform_14(%arg0: i32) -> (i32, i32) {
    %c0_i32 = arith.constant 0 : i32
    %c0_i32_0 = arith.constant 0 : i32
    %c0_i32_1 = arith.constant 0 : i32
    return %c0_i32, %c0_i32_0 : i32, i32
  }
}

</mosaic_0001>

<llo_original>
// kernel: tpu_custom_call.1
$region0: #{tpu_custom_call.1}
  #allocation0 [shape = 'u32[]', space=smem, size = 0x4, offset = 0x4, fixed_abs, tag = 'smem constant byte address 0x4 - core index']
  #allocation1 [shape = 'u32[72,128]{1,0:T(1,128)}', space=vmem, size = 0x9000, scoped, tag = 'internal scratch']
  %s0 = inlined_call_operand.vmem [shape: f32[64,32], index: 0, kind: input, shape index: {}]
  %s1 = inlined_call_operand.vmem [shape: f32[64,1], index: 1, kind: input, shape index: {}]
  %s2 = inlined_call_operand.vmem [shape: s32[1,96], index: 2, kind: input, shape index: {}]
  %s3 = inlined_call_operand.vmem [shape: s32[96,1], index: 3, kind: input, shape index: {}]
  %s4 = inlined_call_operand.vmem [shape: s32[96,1], index: 4, kind: input, shape index: {}]
  %s5 = inlined_call_operand.vmem [shape: f32[32,64], index: 5, kind: input, shape index: {}]
  %s6 = inlined_call_operand.vmem [shape: f32[1,64], index: 6, kind: input, shape index: {}]
  %s7 = inlined_call_operand.vmem [shape: f32[1,32], index: 7, kind: input, shape index: {}]
  %s8 = inlined_call_operand.vmem [shape: f32[1,32], index: 8, kind: input, shape index: {}]
  %s9 = inlined_call_operand.vmem [shape: f32[32,128], index: 9, kind: input, shape index: {}]
  %s10 = inlined_call_operand.vmem [shape: f32[32,128], index: 10, kind: input, shape index: {}]
  %s11 = inlined_call_operand.vmem [shape: f32[1,128], index: 11, kind: input, shape index: {}]
  %s12 = inlined_call_operand.vmem [shape: f32[1,128], index: 12, kind: input, shape index: {}]
  %s13 = inlined_call_operand.vmem [shape: f32[1,128], index: 13, kind: input, shape index: {}]
  %s14 = inlined_call_operand.hbm [shape: f32[64,128], index: 14, kind: output, shape index: {}]
  %s15 = sld [smem:[#allocation0]]
  $region66: #{tpu_custom_call.1} parent=0
    _
  %s17 = ssub.s32 1, %s15
  %s18 = scalar_select 0, %s17, %s15
  $region1: #{tpu_custom_call.1} parent=0
    #allocation2 [shape = 'u8[32768]{0}', space=vmem, size = 0x8000, scoped, tag = 'output window, operand 0, single buffered']
    #allocation3 [shape = 's32[1]{0}', space=sflag, size = 0x4, scoped, tag = 'scoped memory for tpu_custom_call.1']
    %19 = vsyncpa [#allocation3], 0
    // Predicated region
    $region2: #{tpu_custom_call.1} parent=1 // pred_check
      _
    $region3: #{tpu_custom_call.1} parent=1 // pred_check_branch
      %21 = sbr.rel (0) target = $region5
    $region4: #{tpu_custom_call.1} parent=1 // pred_region
      _
    $region5: #{tpu_custom_call.1} parent=1 // pred_fallthru
      _
    // Predicated region
    $region6: #{tpu_custom_call.1} parent=1 // pred_check
      _
    $region7: #{tpu_custom_call.1} parent=1 // pred_check_branch
      %23 = sbr.rel (0) target = $region9
    $region8: #{tpu_custom_call.1} parent=1 // pred_region
      _
    $region9: #{tpu_custom_call.1} parent=1 // pred_fallthru
      _
    // Predicated region
    $region10: #{tpu_custom_call.1} parent=1 // pred_check
      _
    $region11: #{tpu_custom_call.1} parent=1 // pred_check_branch
      %25 = sbr.rel (0) target = $region13
    $region12: #{tpu_custom_call.1} parent=1 // pred_region
      _
    $region13: #{tpu_custom_call.1} parent=1 // pred_fallthru
      _
    // Predicated region
    $region14: #{tpu_custom_call.1} parent=1 // pred_check
      _
    $region15: #{tpu_custom_call.1} parent=1 // pred_check_branch
      %27 = sbr.rel (0) target = $region17
    $region16: #{tpu_custom_call.1} parent=1 // pred_region
      _
    $region17: #{tpu_custom_call.1} parent=1 // pred_fallthru
      _
    // Predicated region
    $region18: #{tpu_custom_call.1} parent=1 // pred_check
      _
    $region19: #{tpu_custom_call.1} parent=1 // pred_check_branch
      %29 = sbr.rel (0) target = $region21
    $region20: #{tpu_custom_call.1} parent=1 // pred_region
      _
    $region21: #{tpu_custom_call.1} parent=1 // pred_fallthru
      _
    // Predicated region
    $region22: #{tpu_custom_call.1} parent=1 // pred_check
      _
    $region23: #{tpu_custom_call.1} parent=1 // pred_check_branch
      %31 = sbr.rel (0) target = $region25
    $region24: #{tpu_custom_call.1} parent=1 // pred_region
      _
    $region25: #{tpu_custom_call.1} parent=1 // pred_fallthru
      _
    // Predicated region
    $region26: #{tpu_custom_call.1} parent=1 // pred_check
      _
    $region27: #{tpu_custom_call.1} parent=1 // pred_check_branch
      %33 = sbr.rel (0) target = $region29
    $region28: #{tpu_custom_call.1} parent=1 // pred_region
      _
    $region29: #{tpu_custom_call.1} parent=1 // pred_fallthru
      _
    // Predicated region
    $region30: #{tpu_custom_call.1} parent=1 // pred_check
      _
    $region31: #{tpu_custom_call.1} parent=1 // pred_check_branch
      %35 = sbr.rel (0) target = $region33
    $region32: #{tpu_custom_call.1} parent=1 // pred_region
      _
    $region33: #{tpu_custom_call.1} parent=1 // pred_fallthru
      _
    // Predicated region
    $region34: #{tpu_custom_call.1} parent=1 // pred_check
      _
    $region35: #{tpu_custom_call.1} parent=1 // pred_check_branch
      %37 = sbr.rel (0) target = $region37
    $region36: #{tpu_custom_call.1} parent=1 // pred_region
      _
    $region37: #{tpu_custom_call.1} parent=1 // pred_fallthru
      _
    // Predicated region
    $region38: #{tpu_custom_call.1} parent=1 // pred_check
      _
    $region39: #{tpu_custom_call.1} parent=1 // pred_check_branch
      %39 = sbr.rel (0) target = $region41
    $region40: #{tpu_custom_call.1} parent=1 // pred_region
      _
    $region41: #{tpu_custom_call.1} parent=1 // pred_fallthru
      _
    // Predicated region
    $region42: #{tpu_custom_call.1} parent=1 // pred_check
      _
    $region43: #{tpu_custom_call.1} parent=1 // pred_check_branch
      %41 = sbr.rel (0) target = $region45
    $region44: #{tpu_custom_call.1} parent=1 // pred_region
      _
    $region45: #{tpu_custom_call.1} parent=1 // pred_fallthru
      _
    // Predicated region
    $region46: #{tpu_custom_call.1} parent=1 // pred_check
      _
    $region47: #{tpu_custom_call.1} parent=1 // pred_check_branch
      %43 = sbr.rel (0) target = $region49
    $region48: #{tpu_custom_call.1} parent=1 // pred_region
      _
    $region49: #{tpu_custom_call.1} parent=1 // pred_fallthru
      _
    // Predicated region
    $region50: #{tpu_custom_call.1} parent=1 // pred_check
      _
    $region51: #{tpu_custom_call.1} parent=1 // pred_check_branch
      %45 = sbr.rel (0) target = $region53
    $region52: #{tpu_custom_call.1} parent=1 // pred_region
      _
    $region53: #{tpu_custom_call.1} parent=1 // pred_fallthru
      _
    // Predicated region
    $region54: #{tpu_custom_call.1} parent=1 // pred_check
      _
    $region55: #{tpu_custom_call.1} parent=1 // pred_check_branch
      %47 = sbr.rel (0) target = $region57
    $region56: #{tpu_custom_call.1} parent=1 // pred_region
      _
    $region57: #{tpu_custom_call.1} parent=1 // pred_fallthru
      _
    %v49 = vlaneseq
    %v50 = vand.u32 %v49, 127
    %v51 = vld [vmem:[%s3] sm:$0xff]
    %v52 = vld [vmem:[%s3 + $0x8] sm:$0xff]
    %v53 = vld [vmem:[%s3 + $0x10] sm:$0xff]
    %v54 = vld [vmem:[%s3 + $0x18] sm:$0xff]
    %v55 = vld [vmem:[%s3 + $0x20] sm:$0xff]
    %v56 = vld [vmem:[%s3 + $0x28] sm:$0xff]
    %v57 = vld [vmem:[%s3 + $0x30] sm:$0xff]
    %v58 = vld [vmem:[%s3 + $0x38] sm:$0xff]
    %v59 = vld [vmem:[%s3 + $0x40] sm:$0xff]
    %v60 = vld [vmem:[%s3 + $0x48] sm:$0xff]
    %v61 = vld [vmem:[%s3 + $0x50] sm:$0xff]
    %v62 = vld [vmem:[%s3 + $0x58] sm:$0xff]
    %63 = vset.pattern.permute.xlu0 0
    %64 = vperm.xlu0 %63, %v51
    %v65 = vpop.permute.xlu0 %64
    %66 = vset.pattern.permute.xlu0 0
    %67 = vperm.xlu0 %66, %v52
    %v68 = vpop.permute.xlu0 %67
    %69 = vset.pattern.permute.xlu0 0
    %70 = vperm.xlu0 %69, %v53
    %v71 = vpop.permute.xlu0 %70
    %72 = vset.pattern.permute.xlu0 0
    %73 = vperm.xlu0 %72, %v54
    %v74 = vpop.permute.xlu0 %73
    %75 = vset.pattern.permute.xlu0 0
    %76 = vperm.xlu0 %75, %v55
    %v77 = vpop.permute.xlu0 %76
    %78 = vset.pattern.permute.xlu0 0
    %79 = vperm.xlu0 %78, %v56
    %v80 = vpop.permute.xlu0 %79
    %81 = vset.pattern.permute.xlu0 0
    %82 = vperm.xlu0 %81, %v57
    %v83 = vpop.permute.xlu0 %82
    %84 = vset.pattern.permute.xlu0 0
    %85 = vperm.xlu0 %84, %v58
    %v86 = vpop.permute.xlu0 %85
    %87 = vset.pattern.permute.xlu0 0
    %88 = vperm.xlu0 %87, %v59
    %v89 = vpop.permute.xlu0 %88
    %90 = vset.pattern.permute.xlu0 0
    %91 = vperm.xlu0 %90, %v60
    %v92 = vpop.permute.xlu0 %91
    %93 = vset.pattern.permute.xlu0 0
    %94 = vperm.xlu0 %93, %v61
    %v95 = vpop.permute.xlu0 %94
    %96 = vset.pattern.permute.xlu0 0
    %97 = vperm.xlu0 %96, %v62
    %v98 = vpop.permute.xlu0 %97
    %vm99 = vcmp.eq.s32.totalorder %v65, %v50
    %vm100 = vcmp.eq.s32.totalorder %v68, %v50
    %vm101 = vcmp.eq.s32.totalorder %v71, %v50
    %vm102 = vcmp.eq.s32.totalorder %v74, %v50
    %vm103 = vcmp.eq.s32.totalorder %v77, %v50
    %vm104 = vcmp.eq.s32.totalorder %v80, %v50
    %vm105 = vcmp.eq.s32.totalorder %v83, %v50
    %vm106 = vcmp.eq.s32.totalorder %v86, %v50
    %vm107 = vcmp.eq.s32.totalorder %v89, %v50
    %vm108 = vcmp.eq.s32.totalorder %v92, %v50
    %vm109 = vcmp.eq.s32.totalorder %v95, %v50
    %vm110 = vcmp.eq.s32.totalorder %v98, %v50
    %v111 = vsel %vm99, 1, 0
    %v112 = vsel %vm100, 1, 0
    %v113 = vsel %vm101, 1, 0
    %v114 = vsel %vm102, 1, 0
    %v115 = vsel %vm103, 1, 0
    %v116 = vsel %vm104, 1, 0
    %v117 = vsel %vm105, 1, 0
    %v118 = vsel %vm106, 1, 0
    %v119 = vsel %vm107, 1, 0
    %v120 = vsel %vm108, 1, 0
    %v121 = vsel %vm109, 1, 0
    %v122 = vsel %vm110, 1, 0
    %v123 = vcvt.s32.f32 %v111
    %v124 = vcvt.s32.f32 %v112
    %v125 = vcvt.s32.f32 %v113
    %v126 = vcvt.s32.f32 %v114
    %v127 = vcvt.s32.f32 %v115
    %v128 = vcvt.s32.f32 %v116
    %v129 = vcvt.s32.f32 %v117
    %v130 = vcvt.s32.f32 %v118
    %v131 = vcvt.s32.f32 %v119
    %v132 = vcvt.s32.f32 %v120
    %v133 = vcvt.s32.f32 %v121
    %v134 = vcvt.s32.f32 %v122
    %v135 = vpack.c.bf16 %v124, %v123
    %v136 = vpack.c.bf16 %v126, %v125
    %v137 = vpack.c.bf16 %v128, %v127
    %v138 = vpack.c.bf16 %v130, %v129
    %v139 = vpack.c.bf16 %v132, %v131
    %v140 = vpack.c.bf16 %v134, %v133
    %v141 = vld [vmem:[%s0] sm:$0xff]
    %v142 = vld [vmem:[%s0 + $0x8] sm:$0xff]
    %v143 = vld [vmem:[%s0 + $0x10] sm:$0xff]
    %v144 = vld [vmem:[%s0 + $0x18] sm:$0xff]
    %v145 = vld [vmem:[%s0 + $0x20] sm:$0xff]
    %v146 = vld [vmem:[%s0 + $0x28] sm:$0xff]
    %v147 = vld [vmem:[%s0 + $0x30] sm:$0xff]
    %v148 = vld [vmem:[%s0 + $0x38] sm:$0xff]
    %v149 = vld [vmem:[%s5] sm:$0xff]
    %v150 = vld [vmem:[%s5 + $0x8] sm:$0xff]
    %v151 = vld [vmem:[%s5 + $0x10] sm:$0xff]
    %v152 = vld [vmem:[%s5 + $0x18] sm:$0xff]
    %v153 = vld [vmem:[%s6] sm:$0x1]
    %v155 = vperm.slane %v153, 0
    %vm157 = vcmask 261120
    %v159 = vsel %vm157, %v141, 0
    %v162 = vsel %vm157, %v142, 0
    %v165 = vsel %vm157, %v143, 0
    %v168 = vsel %vm157, %v144, 0
    %v171 = vsel %vm157, %v145, 0
    %v174 = vsel %vm157, %v146, 0
    %v177 = vsel %vm157, %v147, 0
    %v180 = vsel %vm157, %v148, 0
    %182 = vmatpush.msra.mxu0 0.0
    %183 = vmatpush.msra.mxu0 0.0
    %184 = vmatpush.msra.mxu0 0.0
    %185 = vmatpush.msra.mxu0 0.0
    %186 = vmatpush.msra.mxu0 0.0
    %187 = vmatpush.msra.mxu0 0.0
    %188 = vmatpush.msra.mxu0 0.0
    %189 = vmatpush.msra.mxu0 0.0
    %190 = vmatpush.msra.mxu0 0.0
    %191 = vmatpush.msra.mxu0 0.0
    %192 = vmatpush.msra.mxu0 0.0
    %193 = vmatpush.msra.mxu0 0.0
    %194 = vmatpush.msra.mxu0 %v152
    %195 = vmatpush.msra.mxu0 %v151
    %196 = vmatpush.msra.mxu0 %v150
    %197 = vmatpush.msra.mxu0 %v149
    %198 = vmatmul.f32.gmra.mxu0 %v159
    %v199 = vpop.f32.mrf.mxu0
    %v200 = vadd.f32 %v155, %v199
    %201 = vmatmul.f32.gmra.mxu0 %v162
    %v202 = vpop.f32.mrf.mxu0
    %v203 = vadd.f32 %v155, %v202
    %204 = vmatmul.f32.gmra.mxu0 %v165
    %v205 = vpop.f32.mrf.mxu0
    %v206 = vadd.f32 %v155, %v205
    %207 = vmatmul.f32.gmra.mxu0 %v168
    %v208 = vpop.f32.mrf.mxu0
    %v209 = vadd.f32 %v155, %v208
    %210 = vmatmul.f32.gmra.mxu0 %v171
    %v211 = vpop.f32.mrf.mxu0
    %v212 = vadd.f32 %v155, %v211
    %213 = vmatmul.f32.gmra.mxu0 %v174
    %v214 = vpop.f32.mrf.mxu0
    %v215 = vadd.f32 %v155, %v214
    %216 = vmatmul.f32.gmra.mxu0 %v177
    %v217 = vpop.f32.mrf.mxu0
    %v218 = vadd.f32 %v155, %v217
    %219 = vmatmul.f32.gmra.mxu0 %v180
    %v220 = vpop.f32.mrf.mxu0
    %v221 = vadd.f32 %v155, %v220
    %222 = vdwg.mxu0
    %v223 = vmax.f32 %v200, 0.0
    %v224 = vmax.f32 %v203, 0.0
    %v225 = vmax.f32 %v206, 0.0
    %v226 = vmax.f32 %v209, 0.0
    %v227 = vmax.f32 %v212, 0.0
    %v228 = vmax.f32 %v215, 0.0
    %v229 = vmax.f32 %v218, 0.0
    %v230 = vmax.f32 %v221, 0.0
    %v231 = vld [vmem:[%s7] sm:$0x1]
    %v232 = vld [vmem:[%s8] sm:$0x1]
    %241 = vrot.lane.b32.xlu0 %v223, 96
    %v242 = vpop.permute.xlu0 %241
    %243 = vrot.lane.b32.xlu0 %v224, 96
    %v244 = vpop.permute.xlu0 %243
    %245 = vrot.lane.b32.xlu0 %v225, 96
    %v246 = vpop.permute.xlu0 %245
    %247 = vrot.lane.b32.xlu0 %v226, 96
    %v248 = vpop.permute.xlu0 %247
    %249 = vrot.lane.b32.xlu0 %v227, 96
    %v250 = vpop.permute.xlu0 %249
    %251 = vrot.lane.b32.xlu0 %v228, 96
    %v252 = vpop.permute.xlu0 %251
    %253 = vrot.lane.b32.xlu0 %v229, 96
    %v254 = vpop.permute.xlu0 %253
    %255 = vrot.lane.b32.xlu0 %v230, 96
    %v256 = vpop.permute.xlu0 %255
    %v265 = vsel %vm157, %v242, 0.0
    %266 = vadd.xlane.f32.xlu0 %v265
    %v267 = vpop.xlane.xlu0 %266
    %v268 = vsel %vm157, %v244, 0.0
    %269 = vadd.xlane.f32.xlu0 %v268
    %v270 = vpop.xlane.xlu0 %269
    %v271 = vsel %vm157, %v246, 0.0
    %272 = vadd.xlane.f32.xlu0 %v271
    %v273 = vpop.xlane.xlu0 %272
    %v274 = vsel %vm157, %v248, 0.0
    %275 = vadd.xlane.f32.xlu0 %v274
    %v276 = vpop.xlane.xlu0 %275
    %v277 = vsel %vm157, %v250, 0.0
    %278 = vadd.xlane.f32.xlu0 %v277
    %v279 = vpop.xlane.xlu0 %278
    %v280 = vsel %vm157, %v252, 0.0
    %281 = vadd.xlane.f32.xlu0 %v280
    %v282 = vpop.xlane.xlu0 %281
    %v283 = vsel %vm157, %v254, 0.0
    %284 = vadd.xlane.f32.xlu0 %v283
    %v285 = vpop.xlane.xlu0 %284
    %v286 = vsel %vm157, %v256, 0.0
    %287 = vadd.xlane.f32.xlu0 %v286
    %v288 = vpop.xlane.xlu0 %287
    %v289 = vrcp.pop 32.0
    %v290 = vmul.f32 32.0, %v289
    %v291 = vsub.f32 1.0, %v290
    %v292 = vmul.f32 %v289, %v291
    %v293 = vadd.f32 %v289, %v292
    %vm294 = vweird.f32 %v289
    %v295 = vsel %vm294, %v289, %v293
    %v296 = vmul.f32 %v267, %v295
    %v297 = vmul.f32 %v270, %v295
    %v298 = vmul.f32 %v273, %v295
    %v299 = vmul.f32 %v276, %v295
    %v300 = vmul.f32 %v279, %v295
    %v301 = vmul.f32 %v282, %v295
    %v302 = vmul.f32 %v285, %v295
    %v303 = vmul.f32 %v288, %v295
    %v304 = vsub.f32 %v223, %v296
    %v305 = vsub.f32 %v224, %v297
    %v306 = vsub.f32 %v225, %v298
    %v307 = vsub.f32 %v226, %v299
    %v308 = vsub.f32 %v227, %v300
    %v309 = vsub.f32 %v228, %v301
    %v310 = vsub.f32 %v229, %v302
    %v311 = vsub.f32 %v230, %v303
    %v312 = vmul.f32 %v304, %v304
    %v313 = vmul.f32 %v305, %v305
    %v314 = vmul.f32 %v306, %v306
    %v315 = vmul.f32 %v307, %v307
    %v316 = vmul.f32 %v308, %v308
    %v317 = vmul.f32 %v309, %v309
    %v318 = vmul.f32 %v310, %v310
    %v319 = vmul.f32 %v311, %v311
    %328 = vrot.lane.b32.xlu0 %v312, 96
    %v329 = vpop.permute.xlu0 %328
    %330 = vrot.lane.b32.xlu0 %v313, 96
    %v331 = vpop.permute.xlu0 %330
    %332 = vrot.lane.b32.xlu0 %v314, 96
    %v333 = vpop.permute.xlu0 %332
    %334 = vrot.lane.b32.xlu0 %v315, 96
    %v335 = vpop.permute.xlu0 %334
    %336 = vrot.lane.b32.xlu0 %v316, 96
    %v337 = vpop.permute.xlu0 %336
    %338 = vrot.lane.b32.xlu0 %v317, 96
    %v339 = vpop.permute.xlu0 %338
    %340 = vrot.lane.b32.xlu0 %v318, 96
    %v341 = vpop.permute.xlu0 %340
    %342 = vrot.lane.b32.xlu0 %v319, 96
    %v343 = vpop.permute.xlu0 %342
    %v352 = vsel %vm157, %v329, 0.0
    %353 = vadd.xlane.f32.xlu0 %v352
    %v354 = vpop.xlane.xlu0 %353
    %v355 = vsel %vm157, %v331, 0.0
    %356 = vadd.xlane.f32.xlu0 %v355
    %v357 = vpop.xlane.xlu0 %356
    %v358 = vsel %vm157, %v333, 0.0
    %359 = vadd.xlane.f32.xlu0 %v358
    %v360 = vpop.xlane.xlu0 %359
    %v361 = vsel %vm157, %v335, 0.0
    %362 = vadd.xlane.f32.xlu0 %v361
    %v363 = vpop.xlane.xlu0 %362
    %v364 = vsel %vm157, %v337, 0.0
    %365 = vadd.xlane.f32.xlu0 %v364
    %v366 = vpop.xlane.xlu0 %365
    %v367 = vsel %vm157, %v339, 0.0
    %368 = vadd.xlane.f32.xlu0 %v367
    %v369 = vpop.xlane.xlu0 %368
    %v370 = vsel %vm157, %v341, 0.0
    %371 = vadd.xlane.f32.xlu0 %v370
    %v372 = vpop.xlane.xlu0 %371
    %v373 = vsel %vm157, %v343, 0.0
    %374 = vadd.xlane.f32.xlu0 %v373
    %v375 = vpop.xlane.xlu0 %374
    %v376 = vmul.f32 %v354, %v295
    %v377 = vmul.f32 %v357, %v295
    %v378 = vmul.f32 %v360, %v295
    %v379 = vmul.f32 %v363, %v295
    %v380 = vmul.f32 %v366, %v295
    %v381 = vmul.f32 %v369, %v295
    %v382 = vmul.f32 %v372, %v295
    %v383 = vmul.f32 %v375, %v295
    %v384 = vadd.f32 %v376, 1e-05
    %v385 = vadd.f32 %v377, 1e-05
    %v386 = vadd.f32 %v378, 1e-05
    %v387 = vadd.f32 %v379, 1e-05
    %v388 = vadd.f32 %v380, 1e-05
    %v389 = vadd.f32 %v381, 1e-05
    %v390 = vadd.f32 %v382, 1e-05
    %v391 = vadd.f32 %v383, 1e-05
    %v392 = vrsqrt.pop %v384
    %v393 = vmul.f32 %v392, %v384
    %v394 = vmul.f32 %v393, %v392
    %v395 = vmul.f32 0.5, %v394
    %v396 = vsub.f32 1.5, %v395
    %v397 = vmul.f32 %v392, %v396
    %vm398 = vweird.f32 %v384
    %vm399 = vweird.f32 %v392
    %vm400 = vmor %vm398, %vm399
    %v401 = vsel %vm400, %v392, %v397
    %v402 = vrsqrt.pop %v385
    %v403 = vmul.f32 %v402, %v385
    %v404 = vmul.f32 %v403, %v402
    %v405 = vmul.f32 0.5, %v404
    %v406 = vsub.f32 1.5, %v405
    %v407 = vmul.f32 %v402, %v406
    %vm408 = vweird.f32 %v385
    %vm409 = vweird.f32 %v402
    %vm410 = vmor %vm408, %vm409
    %v411 = vsel %vm410, %v402, %v407
    %v412 = vrsqrt.pop %v386
    %v413 = vmul.f32 %v412, %v386
    %v414 = vmul.f32 %v413, %v412
    %v415 = vmul.f32 0.5, %v414
    %v416 = vsub.f32 1.5, %v415
    %v417 = vmul.f32 %v412, %v416
    %vm418 = vweird.f32 %v386
    %vm419 = vweird.f32 %v412
    %vm420 = vmor %vm418, %vm419
    %v421 = vsel %vm420, %v412, %v417
    %v422 = vrsqrt.pop %v387
    %v423 = vmul.f32 %v422, %v387
    %v424 = vmul.f32 %v423, %v422
    %v425 = vmul.f32 0.5, %v424
    %v426 = vsub.f32 1.5, %v425
    %v427 = vmul.f32 %v422, %v426
    %vm428 = vweird.f32 %v387
    %vm429 = vweird.f32 %v422
    %vm430 = vmor %vm428, %vm429
    %v431 = vsel %vm430, %v422, %v427
    %v432 = vrsqrt.pop %v388
    %v433 = vmul.f32 %v432, %v388
    %v434 = vmul.f32 %v433, %v432
    %v435 = vmul.f32 0.5, %v434
    %v436 = vsub.f32 1.5, %v435
    %v437 = vmul.f32 %v432, %v436
    %vm438 = vweird.f32 %v388
    %vm439 = vweird.f32 %v432
    %vm440 = vmor %vm438, %vm439
    %v441 = vsel %vm440, %v432, %v437
    %v442 = vrsqrt.pop %v389
    %v443 = vmul.f32 %v442, %v389
    %v444 = vmul.f32 %v443, %v442
    %v445 = vmul.f32 0.5, %v444
    %v446 = vsub.f32 1.5, %v445
    %v447 = vmul.f32 %v442, %v446
    %vm448 = vweird.f32 %v389
    %vm449 = vweird.f32 %v442
    %vm450 = vmor %vm448, %vm449
    %v451 = vsel %vm450, %v442, %v447
    %v452 = vrsqrt.pop %v390
    %v453 = vmul.f32 %v452, %v390
    %v454 = vmul.f32 %v453, %v452
    %v455 = vmul.f32 0.5, %v454
    %v456 = vsub.f32 1.5, %v455
    %v457 = vmul.f32 %v452, %v456
    %vm458 = vweird.f32 %v390
    %vm459 = vweird.f32 %v452
    %vm460 = vmor %vm458, %vm459
    %v461 = vsel %vm460, %v452, %v457
    %v462 = vrsqrt.pop %v391
    %v463 = vmul.f32 %v462, %v391
    %v464 = vmul.f32 %v463, %v462
    %v465 = vmul.f32 0.5, %v464
    %v466 = vsub.f32 1.5, %v465
    %v467 = vmul.f32 %v462, %v466
    %vm468 = vweird.f32 %v391
    %vm469 = vweird.f32 %v462
    %vm470 = vmor %vm468, %vm469
    %v471 = vsel %vm470, %v462, %v467
    %v472 = vmul.f32 %v304, %v401
    %v473 = vmul.f32 %v305, %v411
    %v474 = vmul.f32 %v306, %v421
    %v475 = vmul.f32 %v307, %v431
    %v476 = vmul.f32 %v308, %v441
    %v477 = vmul.f32 %v309, %v451
    %v478 = vmul.f32 %v310, %v461
    %v479 = vmul.f32 %v311, %v471
    %v481 = vperm.slane %v231, 0
    %482 = vrot.lane.b32.xlu0 %v481, 32
    %v483 = vpop.permute.xlu0 %482
    %v485 = vmul.f32 %v472, %v483
    %v486 = vmul.f32 %v473, %v483
    %v487 = vmul.f32 %v474, %v483
    %v488 = vmul.f32 %v475, %v483
    %v489 = vmul.f32 %v476, %v483
    %v490 = vmul.f32 %v477, %v483
    %v491 = vmul.f32 %v478, %v483
    %v492 = vmul.f32 %v479, %v483
    %v494 = vperm.slane %v232, 0
    %495 = vrot.lane.b32.xlu0 %v494, 32
    %v496 = vpop.permute.xlu0 %495
    %v498 = vadd.f32 %v485, %v496
    %v499 = vadd.f32 %v486, %v496
    %v500 = vadd.f32 %v487, %v496
    %v501 = vadd.f32 %v488, %v496
    %v502 = vadd.f32 %v489, %v496
    %v503 = vadd.f32 %v490, %v496
    %v504 = vadd.f32 %v491, %v496
    %v505 = vadd.f32 %v492, %v496
    %v506 = vld [vmem:[%s1] sm:$0xff]
    %v507 = vld [vmem:[%s1 + $0x8] sm:$0xff]
    %v508 = vld [vmem:[%s1 + $0x10] sm:$0xff]
    %v509 = vld [vmem:[%s1 + $0x18] sm:$0xff]
    %v510 = vld [vmem:[%s1 + $0x20] sm:$0xff]
    %v511 = vld [vmem:[%s1 + $0x28] sm:$0xff]
    %v512 = vld [vmem:[%s1 + $0x30] sm:$0xff]
    %v513 = vld [vmem:[%s1 + $0x38] sm:$0xff]
    %522 = vrot.lane.b32.xlu0 %v506, 32
    %v523 = vpop.permute.xlu0 %522
    %524 = vrot.lane.b32.xlu0 %v507, 32
    %v525 = vpop.permute.xlu0 %524
    %526 = vrot.lane.b32.xlu0 %v508, 32
    %v527 = vpop.permute.xlu0 %526
    %528 = vrot.lane.b32.xlu0 %v509, 32
    %v529 = vpop.permute.xlu0 %528
    %530 = vrot.lane.b32.xlu0 %v510, 32
    %v531 = vpop.permute.xlu0 %530
    %532 = vrot.lane.b32.xlu0 %v511, 32
    %v533 = vpop.permute.xlu0 %532
    %534 = vrot.lane.b32.xlu0 %v512, 32
    %v535 = vpop.permute.xlu0 %534
    %536 = vrot.lane.b32.xlu0 %v513, 32
    %v537 = vpop.permute.xlu0 %536
    %v546 = vsel %vm157, %v200, %v523
    %v547 = vsel %vm157, %v203, %v525
    %v548 = vsel %vm157, %v206, %v527
    %v549 = vsel %vm157, %v209, %v529
    %v550 = vsel %vm157, %v212, %v531
    %v551 = vsel %vm157, %v215, %v533
    %v552 = vsel %vm157, %v218, %v535
    %v553 = vsel %vm157, %v221, %v537
    %v554 = vpack.c.bf16 %v547, %v546
    %v555 = vpack.c.bf16 %v549, %v548
    %v556 = vpack.c.bf16 %v551, %v550
    %v557 = vpack.c.bf16 %v553, %v552
    %vm558 = vcmask 523264
    %v560 = vsel %vm558, %v135, 0
    %v563 = vsel %vm558, %v136, 0
    %v566 = vsel %vm558, %v137, 0
    %v569 = vsel %vm558, %v138, 0
    %v572 = vsel %vm558, %v139, 0
    %v575 = vsel %vm558, %v140, 0
    %577 = vmatpush.bf16.msra.mxu0 0
    %578 = vmatpush.bf16.msra.mxu0 0
    %579 = vmatpush.bf16.msra.mxu0 0
    %580 = vmatpush.bf16.msra.mxu0 0
    %581 = vmatpush.bf16.msra.mxu0 %v557
    %582 = vmatpush.bf16.msra.mxu0 %v556
    %583 = vmatpush.bf16.msra.mxu0 %v555
    %584 = vmatpush.bf16.msra.mxu0 %v554
    %585 = vmatmul.bf16.gmra.mxu0 %v560
    %v586 = vpop.f32.mrf.mxu0
    %v587 = vadd.f32 0.0, %v586
    %v588 = vpop.f32.mrf.mxu0
    %v589 = vadd.f32 0.0, %v588
    %590 = vmatmul.bf16.gmra.mxu0 %v563
    %v591 = vpop.f32.mrf.mxu0
    %v592 = vadd.f32 0.0, %v591
    %v593 = vpop.f32.mrf.mxu0
    %v594 = vadd.f32 0.0, %v593
    %595 = vmatmul.bf16.gmra.mxu0 %v566
    %v596 = vpop.f32.mrf.mxu0
    %v597 = vadd.f32 0.0, %v596
    %v598 = vpop.f32.mrf.mxu0
    %v599 = vadd.f32 0.0, %v598
    %600 = vmatmul.bf16.gmra.mxu0 %v569
    %v601 = vpop.f32.mrf.mxu0
    %v602 = vadd.f32 0.0, %v601
    %v603 = vpop.f32.mrf.mxu0
    %v604 = vadd.f32 0.0, %v603
    %605 = vmatmul.bf16.gmra.mxu0 %v572
    %v606 = vpop.f32.mrf.mxu0
    %v607 = vadd.f32 0.0, %v606
    %v608 = vpop.f32.mrf.mxu0
    %v609 = vadd.f32 0.0, %v608
    %610 = vmatmul.bf16.gmra.mxu0 %v575
    %v611 = vpop.f32.mrf.mxu0
    %v612 = vadd.f32 0.0, %v611
    %v613 = vpop.f32.mrf.mxu0
    %v614 = vadd.f32 0.0, %v613
    %615 = vdwg.mxu0
    %v616 = vld [vmem:[%s9] sm:$0xff]
    %v617 = vld [vmem:[%s9 + $0x8] sm:$0xff]
    %v618 = vld [vmem:[%s9 + $0x10] sm:$0xff]
    %v619 = vld [vmem:[%s9 + $0x18] sm:$0xff]
    %v621 = vsel %vm157, %v587, 0
    %v624 = vsel %vm157, %v589, 0
    %v627 = vsel %vm157, %v592, 0
    %v630 = vsel %vm157, %v594, 0
    %v633 = vsel %vm157, %v597, 0
    %v636 = vsel %vm157, %v599, 0
    %v639 = vsel %vm157, %v602, 0
    %v642 = vsel %vm157, %v604, 0
    %v645 = vsel %vm157, %v607, 0
    %v648 = vsel %vm157, %v609, 0
    %v651 = vsel %vm157, %v612, 0
    %v654 = vsel %vm157, %v614, 0
    %656 = vmatpush.msra.mxu0 0.0
    %657 = vmatpush.msra.mxu0 0.0
    %658 = vmatpush.msra.mxu0 0.0
    %659 = vmatpush.msra.mxu0 0.0
    %660 = vmatpush.msra.mxu0 0.0
    %661 = vmatpush.msra.mxu0 0.0
    %662 = vmatpush.msra.mxu0 0.0
    %663 = vmatpush.msra.mxu0 0.0
    %664 = vmatpush.msra.mxu0 0.0
    %665 = vmatpush.msra.mxu0 0.0
    %666 = vmatpush.msra.mxu0 0.0
    %667 = vmatpush.msra.mxu0 0.0
    %668 = vmatpush.msra.mxu0 %v619
    %669 = vmatpush.msra.mxu0 %v618
    %670 = vmatpush.msra.mxu0 %v617
    %671 = vmatpush.msra.mxu0 %v616
    %672 = vmatmul.f32.gmra.mxu0 %v621
    %v673 = vpop.f32.mrf.mxu0
    %v674 = vadd.f32 0.0, %v673
    %675 = vmatmul.f32.gmra.mxu0 %v624
    %v676 = vpop.f32.mrf.mxu0
    %v677 = vadd.f32 0.0, %v676
    %678 = vmatmul.f32.gmra.mxu0 %v627
    %v679 = vpop.f32.mrf.mxu0
    %v680 = vadd.f32 0.0, %v679
    %681 = vmatmul.f32.gmra.mxu0 %v630
    %v682 = vpop.f32.mrf.mxu0
    %v683 = vadd.f32 0.0, %v682
    %684 = vmatmul.f32.gmra.mxu0 %v633
    %v685 = vpop.f32.mrf.mxu0
    %v686 = vadd.f32 0.0, %v685
    %687 = vmatmul.f32.gmra.mxu0 %v636
    %v688 = vpop.f32.mrf.mxu0
    %v689 = vadd.f32 0.0, %v688
    %690 = vmatmul.f32.gmra.mxu0 %v639
    %v691 = vpop.f32.mrf.mxu0
    %v692 = vadd.f32 0.0, %v691
    %693 = vmatmul.f32.gmra.mxu0 %v642
    %v694 = vpop.f32.mrf.mxu0
    %v695 = vadd.f32 0.0, %v694
    %696 = vmatmul.f32.gmra.mxu0 %v645
    %v697 = vpop.f32.mrf.mxu0
    %v698 = vadd.f32 0.0, %v697
    %699 = vmatmul.f32.gmra.mxu0 %v648
    %v700 = vpop.f32.mrf.mxu0
    %v701 = vadd.f32 0.0, %v700
    %702 = vmatmul.f32.gmra.mxu0 %v651
    %v703 = vpop.f32.mrf.mxu0
    %v704 = vadd.f32 0.0, %v703
    %705 = vmatmul.f32.gmra.mxu0 %v654
    %v706 = vpop.f32.mrf.mxu0
    %v707 = vadd.f32 0.0, %v706
    %708 = vdwg.mxu0
    %v709 = vld [vmem:[%s4] sm:$0xff]
    %v710 = vld [vmem:[%s4 + $0x8] sm:$0xff]
    %v711 = vld [vmem:[%s4 + $0x10] sm:$0xff]
    %v712 = vld [vmem:[%s4 + $0x18] sm:$0xff]
    %v713 = vld [vmem:[%s4 + $0x20] sm:$0xff]
    %v714 = vld [vmem:[%s4 + $0x28] sm:$0xff]
    %v715 = vld [vmem:[%s4 + $0x30] sm:$0xff]
    %v716 = vld [vmem:[%s4 + $0x38] sm:$0xff]
    %v717 = vld [vmem:[%s4 + $0x40] sm:$0xff]
    %v718 = vld [vmem:[%s4 + $0x48] sm:$0xff]
    %v719 = vld [vmem:[%s4 + $0x50] sm:$0xff]
    %v720 = vld [vmem:[%s4 + $0x58] sm:$0xff]
    %vm721 = vcmp.eq.s32.totalorder %v709, 0
    %vm722 = vcmp.eq.s32.totalorder %v710, 0
    %vm723 = vcmp.eq.s32.totalorder %v711, 0
    %vm724 = vcmp.eq.s32.totalorder %v712, 0
    %vm725 = vcmp.eq.s32.totalorder %v713, 0
    %vm726 = vcmp.eq.s32.totalorder %v714, 0
    %vm727 = vcmp.eq.s32.totalorder %v715, 0
    %vm728 = vcmp.eq.s32.totalorder %v716, 0
    %vm729 = vcmp.eq.s32.totalorder %v717, 0
    %vm730 = vcmp.eq.s32.totalorder %v718, 0
    %vm731 = vcmp.eq.s32.totalorder %v719, 0
    %vm732 = vcmp.eq.s32.totalorder %v720, 0
    %v733 = vsel %vm721, 1, 0
    %v734 = vsel %vm722, 1, 0
    %v735 = vsel %vm723, 1, 0
    %v736 = vsel %vm724, 1, 0
    %v737 = vsel %vm725, 1, 0
    %v738 = vsel %vm726, 1, 0
    %v739 = vsel %vm727, 1, 0
    %v740 = vsel %vm728, 1, 0
    %v741 = vsel %vm729, 1, 0
    %v742 = vsel %vm730, 1, 0
    %v743 = vsel %vm731, 1, 0
    %v744 = vsel %vm732, 1, 0
    %745 = vset.pattern.permute.xlu0 0
    %746 = vperm.xlu0 %745, %v733
    %v747 = vpop.permute.xlu0 %746
    %748 = vset.pattern.permute.xlu0 0
    %749 = vperm.xlu0 %748, %v734
    %v750 = vpop.permute.xlu0 %749
    %751 = vset.pattern.permute.xlu0 0
    %752 = vperm.xlu0 %751, %v735
    %v753 = vpop.permute.xlu0 %752
    %754 = vset.pattern.permute.xlu0 0
    %755 = vperm.xlu0 %754, %v736
    %v756 = vpop.permute.xlu0 %755
    %757 = vset.pattern.permute.xlu0 0
    %758 = vperm.xlu0 %757, %v737
    %v759 = vpop.permute.xlu0 %758
    %760 = vset.pattern.permute.xlu0 0
    %761 = vperm.xlu0 %760, %v738
    %v762 = vpop.permute.xlu0 %761
    %763 = vset.pattern.permute.xlu0 0
    %764 = vperm.xlu0 %763, %v739
    %v765 = vpop.permute.xlu0 %764
    %766 = vset.pattern.permute.xlu0 0
    %767 = vperm.xlu0 %766, %v740
    %v768 = vpop.permute.xlu0 %767
    %769 = vset.pattern.permute.xlu0 0
    %770 = vperm.xlu0 %769, %v741
    %v771 = vpop.permute.xlu0 %770
    %772 = vset.pattern.permute.xlu0 0
    %773 = vperm.xlu0 %772, %v742
    %v774 = vpop.permute.xlu0 %773
    %775 = vset.pattern.permute.xlu0 0
    %776 = vperm.xlu0 %775, %v743
    %v777 = vpop.permute.xlu0 %776
    %778 = vset.pattern.permute.xlu0 0
    %779 = vperm.xlu0 %778, %v744
    %v780 = vpop.permute.xlu0 %779
    %vm781 = vcmp.eq.s32.totalorder %v747, 1
    %vm782 = vcmp.eq.s32.totalorder %v750, 1
    %vm783 = vcmp.eq.s32.totalorder %v753, 1
    %vm784 = vcmp.eq.s32.totalorder %v756, 1
    %vm785 = vcmp.eq.s32.totalorder %v759, 1
    %vm786 = vcmp.eq.s32.totalorder %v762, 1
    %vm787 = vcmp.eq.s32.totalorder %v765, 1
    %vm788 = vcmp.eq.s32.totalorder %v768, 1
    %vm789 = vcmp.eq.s32.totalorder %v771, 1
    %vm790 = vcmp.eq.s32.totalorder %v774, 1
    %vm791 = vcmp.eq.s32.totalorder %v777, 1
    %vm792 = vcmp.eq.s32.totalorder %v780, 1
    %v793 = vsel %vm781, %v674, 0.0
    %v794 = vsel %vm782, %v677, 0.0
    %v795 = vsel %vm783, %v680, 0.0
    %v796 = vsel %vm784, %v683, 0.0
    %v797 = vsel %vm785, %v686, 0.0
    %v798 = vsel %vm786, %v689, 0.0
    %v799 = vsel %vm787, %v692, 0.0
    %v800 = vsel %vm788, %v695, 0.0
    %v801 = vsel %vm789, %v698, 0.0
    %v802 = vsel %vm790, %v701, 0.0
    %v803 = vsel %vm791, %v704, 0.0
    %v804 = vsel %vm792, %v707, 0.0
    %v805 = vadd.f32 %v793, 0.0
    %v806 = vadd.f32 %v794, 0.0
    %v807 = vadd.f32 %v795, 0.0
    %v808 = vadd.f32 %v796, 0.0
    %v809 = vadd.f32 %v797, 0.0
    %v810 = vadd.f32 %v798, 0.0
    %v811 = vadd.f32 %v799, 0.0
    %v812 = vadd.f32 %v800, 0.0
    %v813 = vadd.f32 %v801, 0.0
    %v814 = vadd.f32 %v802, 0.0
    %v815 = vadd.f32 %v803, 0.0
    %v816 = vadd.f32 %v804, 0.0
    %vm817 = vcmp.eq.s32.totalorder %v709, 1
    %vm818 = vcmp.eq.s32.totalorder %v710, 1
    %vm819 = vcmp.eq.s32.totalorder %v711, 1
    %vm820 = vcmp.eq.s32.totalorder %v712, 1
    %vm821 = vcmp.eq.s32.totalorder %v713, 1
    %vm822 = vcmp.eq.s32.totalorder %v714, 1
    %vm823 = vcmp.eq.s32.totalorder %v715, 1
    %vm824 = vcmp.eq.s32.totalorder %v716, 1
    %vm825 = vcmp.eq.s32.totalorder %v717, 1
    %vm826 = vcmp.eq.s32.totalorder %v718, 1
    %vm827 = vcmp.eq.s32.totalorder %v719, 1
    %vm828 = vcmp.eq.s32.totalorder %v720, 1
    %v829 = vsel %vm817, 1, 0
    %v830 = vsel %vm818, 1, 0
    %v831 = vsel %vm819, 1, 0
    %v832 = vsel %vm820, 1, 0
    %v833 = vsel %vm821, 1, 0
    %v834 = vsel %vm822, 1, 0
    %v835 = vsel %vm823, 1, 0
    %v836 = vsel %vm824, 1, 0
    %v837 = vsel %vm825, 1, 0
    %v838 = vsel %vm826, 1, 0
    %v839 = vsel %vm827, 1, 0
    %v840 = vsel %vm828, 1, 0
    %841 = vset.pattern.permute.xlu0 0
    %842 = vperm.xlu0 %841, %v829
    %v843 = vpop.permute.xlu0 %842
    %844 = vset.pattern.permute.xlu0 0
    %845 = vperm.xlu0 %844, %v830
    %v846 = vpop.permute.xlu0 %845
    %847 = vset.pattern.permute.xlu0 0
    %848 = vperm.xlu0 %847, %v831
    %v849 = vpop.permute.xlu0 %848
    %850 = vset.pattern.permute.xlu0 0
    %851 = vperm.xlu0 %850, %v832
    %v852 = vpop.permute.xlu0 %851
    %853 = vset.pattern.permute.xlu0 0
    %854 = vperm.xlu0 %853, %v833
    %v855 = vpop.permute.xlu0 %854
    %856 = vset.pattern.permute.xlu0 0
    %857 = vperm.xlu0 %856, %v834
    %v858 = vpop.permute.xlu0 %857
    %859 = vset.pattern.permute.xlu0 0
    %860 = vperm.xlu0 %859, %v835
    %v861 = vpop.permute.xlu0 %860
    %862 = vset.pattern.permute.xlu0 0
    %863 = vperm.xlu0 %862, %v836
    %v864 = vpop.permute.xlu0 %863
    %865 = vset.pattern.permute.xlu0 0
    %866 = vperm.xlu0 %865, %v837
    %v867 = vpop.permute.xlu0 %866
    %868 = vset.pattern.permute.xlu0 0
    %869 = vperm.xlu0 %868, %v838
    %v870 = vpop.permute.xlu0 %869
    %871 = vset.pattern.permute.xlu0 0
    %872 = vperm.xlu0 %871, %v839
    %v873 = vpop.permute.xlu0 %872
    %874 = vset.pattern.permute.xlu0 0
    %875 = vperm.xlu0 %874, %v840
    %v876 = vpop.permute.xlu0 %875
    %vm877 = vcmp.eq.s32.totalorder %v843, 1
    %vm878 = vcmp.eq.s32.totalorder %v846, 1
    %vm879 = vcmp.eq.s32.totalorder %v849, 1
    %vm880 = vcmp.eq.s32.totalorder %v852, 1
    %vm881 = vcmp.eq.s32.totalorder %v855, 1
    %vm882 = vcmp.eq.s32.totalorder %v858, 1
    %vm883 = vcmp.eq.s32.totalorder %v861, 1
    %vm884 = vcmp.eq.s32.totalorder %v864, 1
    %vm885 = vcmp.eq.s32.totalorder %v867, 1
    %vm886 = vcmp.eq.s32.totalorder %v870, 1
    %vm887 = vcmp.eq.s32.totalorder %v873, 1
    %vm888 = vcmp.eq.s32.totalorder %v876, 1
    %v889 = vsel %vm877, %v674, 0.0
    %v890 = vsel %vm878, %v677, 0.0
    %v891 = vsel %vm879, %v680, 0.0
    %v892 = vsel %vm880, %v683, 0.0
    %v893 = vsel %vm881, %v686, 0.0
    %v894 = vsel %vm882, %v689, 0.0
    %v895 = vsel %vm883, %v692, 0.0
    %v896 = vsel %vm884, %v695, 0.0
    %v897 = vsel %vm885, %v698, 0.0
    %v898 = vsel %vm886, %v701, 0.0
    %v899 = vsel %vm887, %v704, 0.0
    %v900 = vsel %vm888, %v707, 0.0
    %913 = vrot.lane.b32.xlu0 %v889, 96
    %v914 = vpop.permute.xlu0 %913
    %915 = vrot.lane.b32.xlu0 %v890, 96
    %v916 = vpop.permute.xlu0 %915
    %917 = vrot.lane.b32.xlu0 %v891, 96
    %v918 = vpop.permute.xlu0 %917
    %919 = vrot.lane.b32.xlu0 %v892, 96
    %v920 = vpop.permute.xlu0 %919
    %921 = vrot.lane.b32.xlu0 %v893, 96
    %v922 = vpop.permute.xlu0 %921
    %923 = vrot.lane.b32.xlu0 %v894, 96
    %v924 = vpop.permute.xlu0 %923
    %925 = vrot.lane.b32.xlu0 %v895, 96
    %v926 = vpop.permute.xlu0 %925
    %927 = vrot.lane.b32.xlu0 %v896, 96
    %v928 = vpop.permute.xlu0 %927
    %929 = vrot.lane.b32.xlu0 %v897, 96
    %v930 = vpop.permute.xlu0 %929
    %931 = vrot.lane.b32.xlu0 %v898, 96
    %v932 = vpop.permute.xlu0 %931
    %933 = vrot.lane.b32.xlu0 %v899, 96
    %v934 = vpop.permute.xlu0 %933
    %935 = vrot.lane.b32.xlu0 %v900, 96
    %v936 = vpop.permute.xlu0 %935
    %v949 = vadd.f32 %v805, %v914
    %v950 = vadd.f32 %v806, %v916
    %v951 = vadd.f32 %v807, %v918
    %v952 = vadd.f32 %v808, %v920
    %v953 = vadd.f32 %v809, %v922
    %v954 = vadd.f32 %v810, %v924
    %v955 = vadd.f32 %v811, %v926
    %v956 = vadd.f32 %v812, %v928
    %v957 = vadd.f32 %v813, %v930
    %v958 = vadd.f32 %v814, %v932
    %v959 = vadd.f32 %v815, %v934
    %v960 = vadd.f32 %v816, %v936
    %vm961 = vcmp.eq.s32.totalorder %v709, 2
    %vm962 = vcmp.eq.s32.totalorder %v710, 2
    %vm963 = vcmp.eq.s32.totalorder %v711, 2
    %vm964 = vcmp.eq.s32.totalorder %v712, 2
    %vm965 = vcmp.eq.s32.totalorder %v713, 2
    %vm966 = vcmp.eq.s32.totalorder %v714, 2
    %vm967 = vcmp.eq.s32.totalorder %v715, 2
    %vm968 = vcmp.eq.s32.totalorder %v716, 2
    %vm969 = vcmp.eq.s32.totalorder %v717, 2
    %vm970 = vcmp.eq.s32.totalorder %v718, 2
    %vm971 = vcmp.eq.s32.totalorder %v719, 2
    %vm972 = vcmp.eq.s32.totalorder %v720, 2
    %v973 = vsel %vm961, 1, 0
    %v974 = vsel %vm962, 1, 0
    %v975 = vsel %vm963, 1, 0
    %v976 = vsel %vm964, 1, 0
    %v977 = vsel %vm965, 1, 0
    %v978 = vsel %vm966, 1, 0
    %v979 = vsel %vm967, 1, 0
    %v980 = vsel %vm968, 1, 0
    %v981 = vsel %vm969, 1, 0
    %v982 = vsel %vm970, 1, 0
    %v983 = vsel %vm971, 1, 0
    %v984 = vsel %vm972, 1, 0
    %985 = vset.pattern.permute.xlu0 0
    %986 = vperm.xlu0 %985, %v973
    %v987 = vpop.permute.xlu0 %986
    %988 = vset.pattern.permute.xlu0 0
    %989 = vperm.xlu0 %988, %v974
    %v990 = vpop.permute.xlu0 %989
    %991 = vset.pattern.permute.xlu0 0
    %992 = vperm.xlu0 %991, %v975
    %v993 = vpop.permute.xlu0 %992
    %994 = vset.pattern.permute.xlu0 0
    %995 = vperm.xlu0 %994, %v976
    %v996 = vpop.permute.xlu0 %995
    %997 = vset.pattern.permute.xlu0 0
    %998 = vperm.xlu0 %997, %v977
    %v999 = vpop.permute.xlu0 %998
    %1000 = vset.pattern.permute.xlu0 0
    %1001 = vperm.xlu0 %1000, %v978
    %v1002 = vpop.permute.xlu0 %1001
    %1003 = vset.pattern.permute.xlu0 0
    %1004 = vperm.xlu0 %1003, %v979
    %v1005 = vpop.permute.xlu0 %1004
    %1006 = vset.pattern.permute.xlu0 0
    %1007 = vperm.xlu0 %1006, %v980
    %v1008 = vpop.permute.xlu0 %1007
    %1009 = vset.pattern.permute.xlu0 0
    %1010 = vperm.xlu0 %1009, %v981
    %v1011 = vpop.permute.xlu0 %1010
    %1012 = vset.pattern.permute.xlu0 0
    %1013 = vperm.xlu0 %1012, %v982
    %v1014 = vpop.permute.xlu0 %1013
    %1015 = vset.pattern.permute.xlu0 0
    %1016 = vperm.xlu0 %1015, %v983
    %v1017 = vpop.permute.xlu0 %1016
    %1018 = vset.pattern.permute.xlu0 0
    %1019 = vperm.xlu0 %1018, %v984
    %v1020 = vpop.permute.xlu0 %1019
    %vm1021 = vcmp.eq.s32.totalorder %v987, 1
    %vm1022 = vcmp.eq.s32.totalorder %v990, 1
    %vm1023 = vcmp.eq.s32.totalorder %v993, 1
    %vm1024 = vcmp.eq.s32.totalorder %v996, 1
    %vm1025 = vcmp.eq.s32.totalorder %v999, 1
    %vm1026 = vcmp.eq.s32.totalorder %v1002, 1
    %vm1027 = vcmp.eq.s32.totalorder %v1005, 1
    %vm1028 = vcmp.eq.s32.totalorder %v1008, 1
    %vm1029 = vcmp.eq.s32.totalorder %v1011, 1
    %vm1030 = vcmp.eq.s32.totalorder %v1014, 1
    %vm1031 = vcmp.eq.s32.totalorder %v1017, 1
    %vm1032 = vcmp.eq.s32.totalorder %v1020, 1
    %v1033 = vsel %vm1021, %v674, 0.0
    %v1034 = vsel %vm1022, %v677, 0.0
    %v1035 = vsel %vm1023, %v680, 0.0
    %v1036 = vsel %vm1024, %v683, 0.0
    %v1037 = vsel %vm1025, %v686, 0.0
    %v1038 = vsel %vm1026, %v689, 0.0
    %v1039 = vsel %vm1027, %v692, 0.0
    %v1040 = vsel %vm1028, %v695, 0.0
    %v1041 = vsel %vm1029, %v698, 0.0
    %v1042 = vsel %vm1030, %v701, 0.0
    %v1043 = vsel %vm1031, %v704, 0.0
    %v1044 = vsel %vm1032, %v707, 0.0
    %1057 = vrot.lane.b32.xlu0 %v1033, 64
    %v1058 = vpop.permute.xlu0 %1057
    %1059 = vrot.lane.b32.xlu0 %v1034, 64
    %v1060 = vpop.permute.xlu0 %1059
    %1061 = vrot.lane.b32.xlu0 %v1035, 64
    %v1062 = vpop.permute.xlu0 %1061
    %1063 = vrot.lane.b32.xlu0 %v1036, 64
    %v1064 = vpop.permute.xlu0 %1063
    %1065 = vrot.lane.b32.xlu0 %v1037, 64
    %v1066 = vpop.permute.xlu0 %1065
    %1067 = vrot.lane.b32.xlu0 %v1038, 64
    %v1068 = vpop.permute.xlu0 %1067
    %1069 = vrot.lane.b32.xlu0 %v1039, 64
    %v1070 = vpop.permute.xlu0 %1069
    %1071 = vrot.lane.b32.xlu0 %v1040, 64
    %v1072 = vpop.permute.xlu0 %1071
    %1073 = vrot.lane.b32.xlu0 %v1041, 64
    %v1074 = vpop.permute.xlu0 %1073
    %1075 = vrot.lane.b32.xlu0 %v1042, 64
    %v1076 = vpop.permute.xlu0 %1075
    %1077 = vrot.lane.b32.xlu0 %v1043, 64
    %v1078 = vpop.permute.xlu0 %1077
    %1079 = vrot.lane.b32.xlu0 %v1044, 64
    %v1080 = vpop.permute.xlu0 %1079
    %v1093 = vadd.f32 %v949, %v1058
    %v1094 = vadd.f32 %v950, %v1060
    %v1095 = vadd.f32 %v951, %v1062
    %v1096 = vadd.f32 %v952, %v1064
    %v1097 = vadd.f32 %v953, %v1066
    %v1098 = vadd.f32 %v954, %v1068
    %v1099 = vadd.f32 %v955, %v1070
    %v1100 = vadd.f32 %v956, %v1072
    %v1101 = vadd.f32 %v957, %v1074
    %v1102 = vadd.f32 %v958, %v1076
    %v1103 = vadd.f32 %v959, %v1078
    %v1104 = vadd.f32 %v960, %v1080
    %vm1105 = vcmp.eq.s32.totalorder %v709, 3
    %vm1106 = vcmp.eq.s32.totalorder %v710, 3
    %vm1107 = vcmp.eq.s32.totalorder %v711, 3
    %vm1108 = vcmp.eq.s32.totalorder %v712, 3
    %vm1109 = vcmp.eq.s32.totalorder %v713, 3
    %vm1110 = vcmp.eq.s32.totalorder %v714, 3
    %vm1111 = vcmp.eq.s32.totalorder %v715, 3
    %vm1112 = vcmp.eq.s32.totalorder %v716, 3
    %vm1113 = vcmp.eq.s32.totalorder %v717, 3
    %vm1114 = vcmp.eq.s32.totalorder %v718, 3
    %vm1115 = vcmp.eq.s32.totalorder %v719, 3
    %vm1116 = vcmp.eq.s32.totalorder %v720, 3
    %v1117 = vsel %vm1105, 1, 0
    %v1118 = vsel %vm1106, 1, 0
    %v1119 = vsel %vm1107, 1, 0
    %v1120 = vsel %vm1108, 1, 0
    %v1121 = vsel %vm1109, 1, 0
    %v1122 = vsel %vm1110, 1, 0
    %v1123 = vsel %vm1111, 1, 0
    %v1124 = vsel %vm1112, 1, 0
    %v1125 = vsel %vm1113, 1, 0
    %v1126 = vsel %vm1114, 1, 0
    %v1127 = vsel %vm1115, 1, 0
    %v1128 = vsel %vm1116, 1, 0
    %1129 = vset.pattern.permute.xlu0 0
    %1130 = vperm.xlu0 %1129, %v1117
    %v1131 = vpop.permute.xlu0 %1130
    %1132 = vset.pattern.permute.xlu0 0
    %1133 = vperm.xlu0 %1132, %v1118
    %v1134 = vpop.permute.xlu0 %1133
    %1135 = vset.pattern.permute.xlu0 0
    %1136 = vperm.xlu0 %1135, %v1119
    %v1137 = vpop.permute.xlu0 %1136
    %1138 = vset.pattern.permute.xlu0 0
    %1139 = vperm.xlu0 %1138, %v1120
    %v1140 = vpop.permute.xlu0 %1139
    %1141 = vset.pattern.permute.xlu0 0
    %1142 = vperm.xlu0 %1141, %v1121
    %v1143 = vpop.permute.xlu0 %1142
    %1144 = vset.pattern.permute.xlu0 0
    %1145 = vperm.xlu0 %1144, %v1122
    %v1146 = vpop.permute.xlu0 %1145
    %1147 = vset.pattern.permute.xlu0 0
    %1148 = vperm.xlu0 %1147, %v1123
    %v1149 = vpop.permute.xlu0 %1148
    %1150 = vset.pattern.permute.xlu0 0
    %1151 = vperm.xlu0 %1150, %v1124
    %v1152 = vpop.permute.xlu0 %1151
    %1153 = vset.pattern.permute.xlu0 0
    %1154 = vperm.xlu0 %1153, %v1125
    %v1155 = vpop.permute.xlu0 %1154
    %1156 = vset.pattern.permute.xlu0 0
    %1157 = vperm.xlu0 %1156, %v1126
    %v1158 = vpop.permute.xlu0 %1157
    %1159 = vset.pattern.permute.xlu0 0
    %1160 = vperm.xlu0 %1159, %v1127
    %v1161 = vpop.permute.xlu0 %1160
    %1162 = vset.pattern.permute.xlu0 0
    %1163 = vperm.xlu0 %1162, %v1128
    %v1164 = vpop.permute.xlu0 %1163
    %vm1165 = vcmp.eq.s32.totalorder %v1131, 1
    %vm1166 = vcmp.eq.s32.totalorder %v1134, 1
    %vm1167 = vcmp.eq.s32.totalorder %v1137, 1
    %vm1168 = vcmp.eq.s32.totalorder %v1140, 1
    %vm1169 = vcmp.eq.s32.totalorder %v1143, 1
    %vm1170 = vcmp.eq.s32.totalorder %v1146, 1
    %vm1171 = vcmp.eq.s32.totalorder %v1149, 1
    %vm1172 = vcmp.eq.s32.totalorder %v1152, 1
    %vm1173 = vcmp.eq.s32.totalorder %v1155, 1
    %vm1174 = vcmp.eq.s32.totalorder %v1158, 1
    %vm1175 = vcmp.eq.s32.totalorder %v1161, 1
    %vm1176 = vcmp.eq.s32.totalorder %v1164, 1
    %v1177 = vsel %vm1165, %v674, 0.0
    %v1178 = vsel %vm1166, %v677, 0.0
    %v1179 = vsel %vm1167, %v680, 0.0
    %v1180 = vsel %vm1168, %v683, 0.0
    %v1181 = vsel %vm1169, %v686, 0.0
    %v1182 = vsel %vm1170, %v689, 0.0
    %v1183 = vsel %vm1171, %v692, 0.0
    %v1184 = vsel %vm1172, %v695, 0.0
    %v1185 = vsel %vm1173, %v698, 0.0
    %v1186 = vsel %vm1174, %v701, 0.0
    %v1187 = vsel %vm1175, %v704, 0.0
    %v1188 = vsel %vm1176, %v707, 0.0
    %1201 = vrot.lane.b32.xlu0 %v1177, 32
    %v1202 = vpop.permute.xlu0 %1201
    %1203 = vrot.lane.b32.xlu0 %v1178, 32
    %v1204 = vpop.permute.xlu0 %1203
    %1205 = vrot.lane.b32.xlu0 %v1179, 32
    %v1206 = vpop.permute.xlu0 %1205
    %1207 = vrot.lane.b32.xlu0 %v1180, 32
    %v1208 = vpop.permute.xlu0 %1207
    %1209 = vrot.lane.b32.xlu0 %v1181, 32
    %v1210 = vpop.permute.xlu0 %1209
    %1211 = vrot.lane.b32.xlu0 %v1182, 32
    %v1212 = vpop.permute.xlu0 %1211
    %1213 = vrot.lane.b32.xlu0 %v1183, 32
    %v1214 = vpop.permute.xlu0 %1213
    %1215 = vrot.lane.b32.xlu0 %v1184, 32
    %v1216 = vpop.permute.xlu0 %1215
    %1217 = vrot.lane.b32.xlu0 %v1185, 32
    %v1218 = vpop.permute.xlu0 %1217
    %1219 = vrot.lane.b32.xlu0 %v1186, 32
    %v1220 = vpop.permute.xlu0 %1219
    %1221 = vrot.lane.b32.xlu0 %v1187, 32
    %v1222 = vpop.permute.xlu0 %1221
    %1223 = vrot.lane.b32.xlu0 %v1188, 32
    %v1224 = vpop.permute.xlu0 %1223
    %v1237 = vadd.f32 %v1093, %v1202
    %v1238 = vadd.f32 %v1094, %v1204
    %v1239 = vadd.f32 %v1095, %v1206
    %v1240 = vadd.f32 %v1096, %v1208
    %v1241 = vadd.f32 %v1097, %v1210
    %v1242 = vadd.f32 %v1098, %v1212
    %v1243 = vadd.f32 %v1099, %v1214
    %v1244 = vadd.f32 %v1100, %v1216
    %v1245 = vadd.f32 %v1101, %v1218
    %v1246 = vadd.f32 %v1102, %v1220
    %v1247 = vadd.f32 %v1103, %v1222
    %v1248 = vadd.f32 %v1104, %v1224
    %v1249 = vsel %vm157, %v1237, -inf
    %v1250 = vsel %vm157, %v1238, -inf
    %v1251 = vsel %vm157, %v1239, -inf
    %v1252 = vsel %vm157, %v1240, -inf
    %v1253 = vsel %vm157, %v1241, -inf
    %v1254 = vmax.f32 %v1249, %v1253
    %v1255 = vsel %vm157, %v1242, -inf
    %v1256 = vmax.f32 %v1250, %v1255
    %v1257 = vsel %vm157, %v1243, -inf
    %v1258 = vmax.f32 %v1251, %v1257
    %v1259 = vsel %vm157, %v1244, -inf
    %v1260 = vmax.f32 %v1252, %v1259
    %v1261 = vsel %vm157, %v1245, -inf
    %v1262 = vmax.f32 %v1254, %v1261
    %v1263 = vsel %vm157, %v1246, -inf
    %v1264 = vmax.f32 %v1256, %v1263
    %v1265 = vsel %vm157, %v1247, -inf
    %v1266 = vmax.f32 %v1258, %v1265
    %v1267 = vsel %vm157, %v1248, -inf
    %v1268 = vmax.f32 %v1260, %v1267
    %v1269 = vmax.f32 %v1262, %v1264
    %v1270 = vmax.f32 %v1266, %v1268
    %v1271 = vmax.f32 %v1269, %v1270
    %v1272 = vrot.slane %v1271, 4
    %v1273 = vmax.f32 %v1271, %v1272
    %v1274 = vrot.slane %v1273, 2
    %v1275 = vmax.f32 %v1273, %v1274
    %v1276 = vrot.slane %v1275, 1
    %v1277 = vmax.f32 %v1275, %v1276
    %v1278 = vsub.f32 %v1237, %v1277
    %v1279 = vsub.f32 %v1238, %v1277
    %v1280 = vsub.f32 %v1239, %v1277
    %v1281 = vsub.f32 %v1240, %v1277
    %v1282 = vsub.f32 %v1241, %v1277
    %v1283 = vsub.f32 %v1242, %v1277
    %v1284 = vsub.f32 %v1243, %v1277
    %v1285 = vsub.f32 %v1244, %v1277
    %v1286 = vsub.f32 %v1245, %v1277
    %v1287 = vsub.f32 %v1246, %v1277
    %v1288 = vsub.f32 %v1247, %v1277
    %v1289 = vsub.f32 %v1248, %v1277
    %v1290 = vmul.f32 %v1278, 1.442695
    %v1291 = vpow.pop %v1290
    %v1292 = vmul.f32 %v1279, 1.442695
    %v1293 = vpow.pop %v1292
    %v1294 = vmul.f32 %v1280, 1.442695
    %v1295 = vpow.pop %v1294
    %v1296 = vmul.f32 %v1281, 1.442695
    %v1297 = vpow.pop %v1296
    %v1298 = vmul.f32 %v1282, 1.442695
    %v1299 = vpow.pop %v1298
    %v1300 = vmul.f32 %v1283, 1.442695
    %v1301 = vpow.pop %v1300
    %v1302 = vmul.f32 %v1284, 1.442695
    %v1303 = vpow.pop %v1302
    %v1304 = vmul.f32 %v1285, 1.442695
    %v1305 = vpow.pop %v1304
    %v1306 = vmul.f32 %v1286, 1.442695
    %v1307 = vpow.pop %v1306
    %v1308 = vmul.f32 %v1287, 1.442695
    %v1309 = vpow.pop %v1308
    %v1310 = vmul.f32 %v1288, 1.442695
    %v1311 = vpow.pop %v1310
    %v1312 = vmul.f32 %v1289, 1.442695
    %v1313 = vpow.pop %v1312
    %v1314 = vlaneseq
    %v1315 = vshrl.u32 %v1314, 7
    %v1316 = vadd.s32 %v1315, 8
    %v1317 = vadd.s32 %v1315, 16
    %v1318 = vadd.s32 %v1315, 24
    %v1319 = vadd.s32 %v1315, 32
    %v1320 = vadd.s32 %v1315, 40
    %v1321 = vadd.s32 %v1315, 48
    %v1322 = vadd.s32 %v1315, 56
    %v1323 = vld [vmem:[%s2] sm:$0x1]
    %v1324 = vperm.slane %v1323, 0
    %vm1325 = vcmp.eq.s32.totalorder %v1324, %v1315
    %vm1326 = vcmp.eq.s32.totalorder %v1324, %v1316
    %vm1327 = vcmp.eq.s32.totalorder %v1324, %v1317
    %vm1328 = vcmp.eq.s32.totalorder %v1324, %v1318
    %vm1329 = vcmp.eq.s32.totalorder %v1324, %v1319
    %vm1330 = vcmp.eq.s32.totalorder %v1324, %v1320
    %vm1331 = vcmp.eq.s32.totalorder %v1324, %v1321
    %vm1332 = vcmp.eq.s32.totalorder %v1324, %v1322
    %v1333 = vsel %vm1325, 1, 0
    %v1334 = vsel %vm1326, 1, 0
    %v1335 = vsel %vm1327, 1, 0
    %v1336 = vsel %vm1328, 1, 0
    %v1337 = vsel %vm1329, 1, 0
    %v1338 = vsel %vm1330, 1, 0
    %v1339 = vsel %vm1331, 1, 0
    %v1340 = vsel %vm1332, 1, 0
    %v1341 = vcvt.s32.f32 %v1333
    %v1342 = vcvt.s32.f32 %v1334
    %v1343 = vcvt.s32.f32 %v1335
    %v1344 = vcvt.s32.f32 %v1336
    %v1345 = vcvt.s32.f32 %v1337
    %v1346 = vcvt.s32.f32 %v1338
    %v1347 = vcvt.s32.f32 %v1339
    %v1348 = vcvt.s32.f32 %v1340
    %v1349 = vpack.c.bf16 %v1342, %v1341
    %v1350 = vpack.c.bf16 %v1344, %v1343
    %v1351 = vpack.c.bf16 %v1346, %v1345
    %v1352 = vpack.c.bf16 %v1348, %v1347
    %1353 = vset.pattern.permute.xlu0 32
    %1354 = vperm.xlu0 %1353, %v587
    %v1355 = vpop.permute.xlu0 %1354
    %1357 = vset.pattern.permute.xlu0 32
    %1358 = vperm.xlu0 %1357, %v589
    %v1359 = vpop.permute.xlu0 %1358
    %1361 = vset.pattern.permute.xlu0 32
    %1362 = vperm.xlu0 %1361, %v592
    %v1363 = vpop.permute.xlu0 %1362
    %1365 = vset.pattern.permute.xlu0 32
    %1366 = vperm.xlu0 %1365, %v594
    %v1367 = vpop.permute.xlu0 %1366
    %1369 = vset.pattern.permute.xlu0 32
    %1370 = vperm.xlu0 %1369, %v597
    %v1371 = vpop.permute.xlu0 %1370
    %1373 = vset.pattern.permute.xlu0 32
    %1374 = vperm.xlu0 %1373, %v599
    %v1375 = vpop.permute.xlu0 %1374
    %1377 = vset.pattern.permute.xlu0 32
    %1378 = vperm.xlu0 %1377, %v602
    %v1379 = vpop.permute.xlu0 %1378
    %1381 = vset.pattern.permute.xlu0 32
    %1382 = vperm.xlu0 %1381, %v604
    %v1383 = vpop.permute.xlu0 %1382
    %1385 = vset.pattern.permute.xlu0 32
    %1386 = vperm.xlu0 %1385, %v607
    %v1387 = vpop.permute.xlu0 %1386
    %1389 = vset.pattern.permute.xlu0 32
    %1390 = vperm.xlu0 %1389, %v609
    %v1391 = vpop.permute.xlu0 %1390
    %1393 = vset.pattern.permute.xlu0 32
    %1394 = vperm.xlu0 %1393, %v612
    %v1395 = vpop.permute.xlu0 %1394
    %1397 = vset.pattern.permute.xlu0 32
    %1398 = vperm.xlu0 %1397, %v614
    %v1399 = vpop.permute.xlu0 %1398
    %v1401 = vmul.f32 %v587, %v1355
    %v1402 = vmul.f32 %v589, %v1359
    %v1403 = vmul.f32 %v592, %v1363
    %v1404 = vmul.f32 %v594, %v1367
    %v1405 = vmul.f32 %v597, %v1371
    %v1406 = vmul.f32 %v599, %v1375
    %v1407 = vmul.f32 %v602, %v1379
    %v1408 = vmul.f32 %v604, %v1383
    %v1409 = vmul.f32 %v607, %v1387
    %v1410 = vmul.f32 %v609, %v1391
    %v1411 = vmul.f32 %v612, %v1395
    %v1412 = vmul.f32 %v614, %v1399
    %v1413 = vmul.f32 %v1237, %v1291
    %v1414 = vmul.f32 %v1238, %v1293
    %v1415 = vmul.f32 %v1239, %v1295
    %v1416 = vmul.f32 %v1240, %v1297
    %v1417 = vmul.f32 %v1241, %v1299
    %v1418 = vmul.f32 %v1242, %v1301
    %v1419 = vmul.f32 %v1243, %v1303
    %v1420 = vmul.f32 %v1244, %v1305
    %v1421 = vmul.f32 %v1245, %v1307
    %v1422 = vmul.f32 %v1246, %v1309
    %v1423 = vmul.f32 %v1247, %v1311
    %v1424 = vmul.f32 %v1248, %v1313
    %1437 = vrot.lane.b32.xlu0 %v1291, 32
    %v1438 = vpop.permute.xlu0 %1437
    %1439 = vrot.lane.b32.xlu0 %v1293, 32
    %v1440 = vpop.permute.xlu0 %1439
    %1441 = vrot.lane.b32.xlu0 %v1295, 32
    %v1442 = vpop.permute.xlu0 %1441
    %1443 = vrot.lane.b32.xlu0 %v1297, 32
    %v1444 = vpop.permute.xlu0 %1443
    %1445 = vrot.lane.b32.xlu0 %v1299, 32
    %v1446 = vpop.permute.xlu0 %1445
    %1447 = vrot.lane.b32.xlu0 %v1301, 32
    %v1448 = vpop.permute.xlu0 %1447
    %1449 = vrot.lane.b32.xlu0 %v1303, 32
    %v1450 = vpop.permute.xlu0 %1449
    %1451 = vrot.lane.b32.xlu0 %v1305, 32
    %v1452 = vpop.permute.xlu0 %1451
    %1453 = vrot.lane.b32.xlu0 %v1307, 32
    %v1454 = vpop.permute.xlu0 %1453
    %1455 = vrot.lane.b32.xlu0 %v1309, 32
    %v1456 = vpop.permute.xlu0 %1455
    %1457 = vrot.lane.b32.xlu0 %v1311, 32
    %v1458 = vpop.permute.xlu0 %1457
    %1459 = vrot.lane.b32.xlu0 %v1313, 32
    %v1460 = vpop.permute.xlu0 %1459
    %1485 = vrot.lane.b32.xlu0 %v1413, 64
    %v1486 = vpop.permute.xlu0 %1485
    %1487 = vrot.lane.b32.xlu0 %v1414, 64
    %v1488 = vpop.permute.xlu0 %1487
    %1489 = vrot.lane.b32.xlu0 %v1415, 64
    %v1490 = vpop.permute.xlu0 %1489
    %1491 = vrot.lane.b32.xlu0 %v1416, 64
    %v1492 = vpop.permute.xlu0 %1491
    %1493 = vrot.lane.b32.xlu0 %v1417, 64
    %v1494 = vpop.permute.xlu0 %1493
    %1495 = vrot.lane.b32.xlu0 %v1418, 64
    %v1496 = vpop.permute.xlu0 %1495
    %1497 = vrot.lane.b32.xlu0 %v1419, 64
    %v1498 = vpop.permute.xlu0 %1497
    %1499 = vrot.lane.b32.xlu0 %v1420, 64
    %v1500 = vpop.permute.xlu0 %1499
    %1501 = vrot.lane.b32.xlu0 %v1421, 64
    %v1502 = vpop.permute.xlu0 %1501
    %1503 = vrot.lane.b32.xlu0 %v1422, 64
    %v1504 = vpop.permute.xlu0 %1503
    %1505 = vrot.lane.b32.xlu0 %v1423, 64
    %v1506 = vpop.permute.xlu0 %1505
    %1507 = vrot.lane.b32.xlu0 %v1424, 64
    %v1508 = vpop.permute.xlu0 %1507
    %v1521 = vsel %vm157, %v1401, %v1438
    %v1522 = vsel %vm157, %v1402, %v1440
    %v1523 = vsel %vm157, %v1403, %v1442
    %v1524 = vsel %vm157, %v1404, %v1444
    %v1525 = vsel %vm157, %v1405, %v1446
    %v1526 = vsel %vm157, %v1406, %v1448
    %v1527 = vsel %vm157, %v1407, %v1450
    %v1528 = vsel %vm157, %v1408, %v1452
    %v1529 = vsel %vm157, %v1409, %v1454
    %v1530 = vsel %vm157, %v1410, %v1456
    %v1531 = vsel %vm157, %v1411, %v1458
    %v1532 = vsel %vm157, %v1412, %v1460
    %v1533 = vsel %vm558, %v1521, %v1486
    %v1534 = vsel %vm558, %v1522, %v1488
    %v1535 = vsel %vm558, %v1523, %v1490
    %v1536 = vsel %vm558, %v1524, %v1492
    %v1537 = vsel %vm558, %v1525, %v1494
    %v1538 = vsel %vm558, %v1526, %v1496
    %v1539 = vsel %vm558, %v1527, %v1498
    %v1540 = vsel %vm558, %v1528, %v1500
    %v1541 = vsel %vm558, %v1529, %v1502
    %v1542 = vsel %vm558, %v1530, %v1504
    %v1543 = vsel %vm558, %v1531, %v1506
    %v1544 = vsel %vm558, %v1532, %v1508
    %v1545 = vpack.c.bf16 %v1534, %v1533
    %v1546 = vpack.c.bf16 %v1536, %v1535
    %v1547 = vpack.c.bf16 %v1538, %v1537
    %v1548 = vpack.c.bf16 %v1540, %v1539
    %v1549 = vpack.c.bf16 %v1542, %v1541
    %v1550 = vpack.c.bf16 %v1544, %v1543
    %vm1551 = vcmask 785408
    %v1553 = vsel %vm1551, %v1349, 0
    %v1556 = vsel %vm1551, %v1350, 0
    %v1559 = vsel %vm1551, %v1351, 0
    %v1562 = vsel %vm1551, %v1352, 0
    %1564 = vmatpush.bf16.msra.mxu0 0
    %1565 = vmatpush.bf16.msra.mxu0 0
    %1566 = vmatpush.bf16.msra.mxu0 %v1550
    %1567 = vmatpush.bf16.msra.mxu0 %v1549
    %1568 = vmatpush.bf16.msra.mxu0 %v1548
    %1569 = vmatpush.bf16.msra.mxu0 %v1547
    %1570 = vmatpush.bf16.msra.mxu0 %v1546
    %1571 = vmatpush.bf16.msra.mxu0 %v1545
    %1572 = vmatmul.bf16.gmra.mxu0 %v1553
    %v1573 = vpop.f32.mrf.mxu0
    %v1574 = vadd.f32 0.0, %v1573
    %v1575 = vpop.f32.mrf.mxu0
    %v1576 = vadd.f32 0.0, %v1575
    %1577 = vmatmul.bf16.gmra.mxu0 %v1556
    %v1578 = vpop.f32.mrf.mxu0
    %v1579 = vadd.f32 0.0, %v1578
    %v1580 = vpop.f32.mrf.mxu0
    %v1581 = vadd.f32 0.0, %v1580
    %1582 = vmatmul.bf16.gmra.mxu0 %v1559
    %v1583 = vpop.f32.mrf.mxu0
    %v1584 = vadd.f32 0.0, %v1583
    %v1585 = vpop.f32.mrf.mxu0
    %v1586 = vadd.f32 0.0, %v1585
    %1587 = vmatmul.bf16.gmra.mxu0 %v1562
    %v1588 = vpop.f32.mrf.mxu0
    %v1589 = vadd.f32 0.0, %v1588
    %v1590 = vpop.f32.mrf.mxu0
    %v1591 = vadd.f32 0.0, %v1590
    %1592 = vdwg.mxu0
    %1593 = vset.pattern.permute.xlu0 0
    %1594 = vperm.xlu0 %1593, %v506
    %v1595 = vpop.permute.xlu0 %1594
    %1597 = vset.pattern.permute.xlu0 0
    %1598 = vperm.xlu0 %1597, %v507
    %v1599 = vpop.permute.xlu0 %1598
    %1601 = vset.pattern.permute.xlu0 0
    %1602 = vperm.xlu0 %1601, %v508
    %v1603 = vpop.permute.xlu0 %1602
    %1605 = vset.pattern.permute.xlu0 0
    %1606 = vperm.xlu0 %1605, %v509
    %v1607 = vpop.permute.xlu0 %1606
    %1609 = vset.pattern.permute.xlu0 0
    %1610 = vperm.xlu0 %1609, %v510
    %v1611 = vpop.permute.xlu0 %1610
    %1613 = vset.pattern.permute.xlu0 0
    %1614 = vperm.xlu0 %1613, %v511
    %v1615 = vpop.permute.xlu0 %1614
    %1617 = vset.pattern.permute.xlu0 0
    %1618 = vperm.xlu0 %1617, %v512
    %v1619 = vpop.permute.xlu0 %1618
    %1621 = vset.pattern.permute.xlu0 0
    %1622 = vperm.xlu0 %1621, %v513
    %v1623 = vpop.permute.xlu0 %1622
    %v1625 = vmul.f32 %v1595, %v1574
    %v1626 = vmul.f32 %v1599, %v1576
    %v1627 = vmul.f32 %v1603, %v1579
    %v1628 = vmul.f32 %v1607, %v1581
    %v1629 = vmul.f32 %v1611, %v1584
    %v1630 = vmul.f32 %v1615, %v1586
    %v1631 = vmul.f32 %v1619, %v1589
    %v1632 = vmul.f32 %v1623, %v1591
    %1641 = vrot.lane.b32.xlu0 %v1625, 32
    %v1642 = vpop.permute.xlu0 %1641
    %1643 = vrot.lane.b32.xlu0 %v1626, 32
    %v1644 = vpop.permute.xlu0 %1643
    %1645 = vrot.lane.b32.xlu0 %v1627, 32
    %v1646 = vpop.permute.xlu0 %1645
    %1647 = vrot.lane.b32.xlu0 %v1628, 32
    %v1648 = vpop.permute.xlu0 %1647
    %1649 = vrot.lane.b32.xlu0 %v1629, 32
    %v1650 = vpop.permute.xlu0 %1649
    %1651 = vrot.lane.b32.xlu0 %v1630, 32
    %v1652 = vpop.permute.xlu0 %1651
    %1653 = vrot.lane.b32.xlu0 %v1631, 32
    %v1654 = vpop.permute.xlu0 %1653
    %1655 = vrot.lane.b32.xlu0 %v1632, 32
    %v1656 = vpop.permute.xlu0 %1655
    %v1665 = vadd.f32 %v498, %v1642
    %v1666 = vadd.f32 %v499, %v1644
    %v1667 = vadd.f32 %v500, %v1646
    %v1668 = vadd.f32 %v501, %v1648
    %v1669 = vadd.f32 %v502, %v1650
    %v1670 = vadd.f32 %v503, %v1652
    %v1671 = vadd.f32 %v504, %v1654
    %v1672 = vadd.f32 %v505, %v1656
    %v1673 = vadd.f32 %v1574, 1e-16
    %v1674 = vadd.f32 %v1576, 1e-16
    %v1675 = vadd.f32 %v1579, 1e-16
    %v1676 = vadd.f32 %v1581, 1e-16
    %v1677 = vadd.f32 %v1584, 1e-16
    %v1678 = vadd.f32 %v1586, 1e-16
    %v1679 = vadd.f32 %v1589, 1e-16
    %v1680 = vadd.f32 %v1591, 1e-16
    %v1681 = vrcp.pop %v1673
    %v1682 = vrcp.pop %v1674
    %v1683 = vrcp.pop %v1675
    %v1684 = vrcp.pop %v1676
    %v1685 = vrcp.pop %v1677
    %v1686 = vrcp.pop %v1678
    %v1687 = vrcp.pop %v1679
    %v1688 = vrcp.pop %v1680
    %1697 = vrot.lane.b32.xlu0 %v1681, 32
    %v1698 = vpop.permute.xlu0 %1697
    %1699 = vrot.lane.b32.xlu0 %v1682, 32
    %v1700 = vpop.permute.xlu0 %1699
    %1701 = vrot.lane.b32.xlu0 %v1683, 32
    %v1702 = vpop.permute.xlu0 %1701
    %1703 = vrot.lane.b32.xlu0 %v1684, 32
    %v1704 = vpop.permute.xlu0 %1703
    %1705 = vrot.lane.b32.xlu0 %v1685, 32
    %v1706 = vpop.permute.xlu0 %1705
    %1707 = vrot.lane.b32.xlu0 %v1686, 32
    %v1708 = vpop.permute.xlu0 %1707
    %1709 = vrot.lane.b32.xlu0 %v1687, 32
    %v1710 = vpop.permute.xlu0 %1709
    %1711 = vrot.lane.b32.xlu0 %v1688, 32
    %v1712 = vpop.permute.xlu0 %1711
    %v1721 = vmul.f32 %v1574, %v1698
    %v1722 = vmul.f32 %v1576, %v1700
    %v1723 = vmul.f32 %v1579, %v1702
    %v1724 = vmul.f32 %v1581, %v1704
    %v1725 = vmul.f32 %v1584, %v1706
    %v1726 = vmul.f32 %v1586, %v1708
    %v1727 = vmul.f32 %v1589, %v1710
    %v1728 = vmul.f32 %v1591, %v1712
    %v1729 = vmax.f32 %v1721, 0.0
    %v1730 = vmax.f32 %v1722, 0.0
    %v1731 = vmax.f32 %v1723, 0.0
    %v1732 = vmax.f32 %v1724, 0.0
    %v1733 = vmax.f32 %v1725, 0.0
    %v1734 = vmax.f32 %v1726, 0.0
    %v1735 = vmax.f32 %v1727, 0.0
    %v1736 = vmax.f32 %v1728, 0.0
    %v1737 = vmul.f32 %v1729, 0.1
    %v1738 = vmul.f32 %v1730, 0.1
    %v1739 = vmul.f32 %v1731, 0.1
    %v1740 = vmul.f32 %v1732, 0.1
    %v1741 = vmul.f32 %v1733, 0.1
    %v1742 = vmul.f32 %v1734, 0.1
    %v1743 = vmul.f32 %v1735, 0.1
    %v1744 = vmul.f32 %v1736, 0.1
    %1753 = vrot.lane.b32.xlu0 %v1737, 96
    %v1754 = vpop.permute.xlu0 %1753
    %1755 = vrot.lane.b32.xlu0 %v1738, 96
    %v1756 = vpop.permute.xlu0 %1755
    %1757 = vrot.lane.b32.xlu0 %v1739, 96
    %v1758 = vpop.permute.xlu0 %1757
    %1759 = vrot.lane.b32.xlu0 %v1740, 96
    %v1760 = vpop.permute.xlu0 %1759
    %1761 = vrot.lane.b32.xlu0 %v1741, 96
    %v1762 = vpop.permute.xlu0 %1761
    %1763 = vrot.lane.b32.xlu0 %v1742, 96
    %v1764 = vpop.permute.xlu0 %1763
    %1765 = vrot.lane.b32.xlu0 %v1743, 96
    %v1766 = vpop.permute.xlu0 %1765
    %1767 = vrot.lane.b32.xlu0 %v1744, 96
    %v1768 = vpop.permute.xlu0 %1767
    %v1777 = vadd.f32 %v1665, %v1754
    %v1778 = vadd.f32 %v1666, %v1756
    %v1779 = vadd.f32 %v1667, %v1758
    %v1780 = vadd.f32 %v1668, %v1760
    %v1781 = vadd.f32 %v1669, %v1762
    %v1782 = vadd.f32 %v1670, %v1764
    %v1783 = vadd.f32 %v1671, %v1766
    %v1784 = vadd.f32 %v1672, %v1768
    %v1785 = vld [vmem:[%s10] sm:$0xff]
    %v1786 = vld [vmem:[%s10 + $0x8] sm:$0xff]
    %v1787 = vld [vmem:[%s10 + $0x10] sm:$0xff]
    %v1788 = vld [vmem:[%s10 + $0x18] sm:$0xff]
    %v1789 = vld [vmem:[%s11] sm:$0x1]
    %v1791 = vperm.slane %v1789, 0
    %1801 = vrot.lane.b32.xlu0 %v1777, 96
    %v1802 = vpop.permute.xlu0 %1801
    %1803 = vrot.lane.b32.xlu0 %v1778, 96
    %v1804 = vpop.permute.xlu0 %1803
    %1805 = vrot.lane.b32.xlu0 %v1779, 96
    %v1806 = vpop.permute.xlu0 %1805
    %1807 = vrot.lane.b32.xlu0 %v1780, 96
    %v1808 = vpop.permute.xlu0 %1807
    %1809 = vrot.lane.b32.xlu0 %v1781, 96
    %v1810 = vpop.permute.xlu0 %1809
    %1811 = vrot.lane.b32.xlu0 %v1782, 96
    %v1812 = vpop.permute.xlu0 %1811
    %1813 = vrot.lane.b32.xlu0 %v1783, 96
    %v1814 = vpop.permute.xlu0 %1813
    %1815 = vrot.lane.b32.xlu0 %v1784, 96
    %v1816 = vpop.permute.xlu0 %1815
    %v1817 = vsel %vm157, %v1802, 0
    %v1819 = vsel %vm157, %v1804, 0
    %v1821 = vsel %vm157, %v1806, 0
    %v1823 = vsel %vm157, %v1808, 0
    %v1825 = vsel %vm157, %v1810, 0
    %v1827 = vsel %vm157, %v1812, 0
    %v1829 = vsel %vm157, %v1814, 0
    %v1831 = vsel %vm157, %v1816, 0
    %1833 = vmatpush.msra.mxu0 0.0
    %1834 = vmatpush.msra.mxu0 0.0
    %1835 = vmatpush.msra.mxu0 0.0
    %1836 = vmatpush.msra.mxu0 0.0
    %1837 = vmatpush.msra.mxu0 0.0
    %1838 = vmatpush.msra.mxu0 0.0
    %1839 = vmatpush.msra.mxu0 0.0
    %1840 = vmatpush.msra.mxu0 0.0
    %1841 = vmatpush.msra.mxu0 0.0
    %1842 = vmatpush.msra.mxu0 0.0
    %1843 = vmatpush.msra.mxu0 0.0
    %1844 = vmatpush.msra.mxu0 0.0
    %1845 = vmatpush.msra.mxu0 %v1788
    %1846 = vmatpush.msra.mxu0 %v1787
    %1847 = vmatpush.msra.mxu0 %v1786
    %1848 = vmatpush.msra.mxu0 %v1785
    %1849 = vmatmul.f32.gmra.mxu0 %v1817
    %v1850 = vpop.f32.mrf.mxu0
    %v1851 = vadd.f32 %v1791, %v1850
    %1852 = vmatmul.f32.gmra.mxu0 %v1819
    %v1853 = vpop.f32.mrf.mxu0
    %v1854 = vadd.f32 %v1791, %v1853
    %1855 = vmatmul.f32.gmra.mxu0 %v1821
    %v1856 = vpop.f32.mrf.mxu0
    %v1857 = vadd.f32 %v1791, %v1856
    %1858 = vmatmul.f32.gmra.mxu0 %v1823
    %v1859 = vpop.f32.mrf.mxu0
    %v1860 = vadd.f32 %v1791, %v1859
    %1861 = vmatmul.f32.gmra.mxu0 %v1825
    %v1862 = vpop.f32.mrf.mxu0
    %v1863 = vadd.f32 %v1791, %v1862
    %1864 = vmatmul.f32.gmra.mxu0 %v1827
    %v1865 = vpop.f32.mrf.mxu0
    %v1866 = vadd.f32 %v1791, %v1865
    %1867 = vmatmul.f32.gmra.mxu0 %v1829
    %v1868 = vpop.f32.mrf.mxu0
    %v1869 = vadd.f32 %v1791, %v1868
    %1870 = vmatmul.f32.gmra.mxu0 %v1831
    %v1871 = vpop.f32.mrf.mxu0
    %v1872 = vadd.f32 %v1791, %v1871
    %1873 = vdwg.mxu0
    %vm1874 = vcmp.lt.s32.totalorder %v50, 16
    %1875 = vadd.xlane.f32.xlu0 %v1851
    %v1876 = vpop.xlane.xlu0 %1875
    %1877 = vadd.xlane.f32.xlu0 %v1854
    %v1878 = vpop.xlane.xlu0 %1877
    %1879 = vadd.xlane.f32.xlu0 %v1857
    %v1880 = vpop.xlane.xlu0 %1879
    %1881 = vadd.xlane.f32.xlu0 %v1860
    %v1882 = vpop.xlane.xlu0 %1881
    %1883 = vadd.xlane.f32.xlu0 %v1863
    %v1884 = vpop.xlane.xlu0 %1883
    %1885 = vadd.xlane.f32.xlu0 %v1866
    %v1886 = vpop.xlane.xlu0 %1885
    %1887 = vadd.xlane.f32.xlu0 %v1869
    %v1888 = vpop.xlane.xlu0 %1887
    %1889 = vadd.xlane.f32.xlu0 %v1872
    %v1890 = vpop.xlane.xlu0 %1889
    %v1891 = vrcp.pop 16.0
    %v1892 = vmul.f32 16.0, %v1891
    %v1893 = vsub.f32 1.0, %v1892
    %v1894 = vmul.f32 %v1891, %v1893
    %v1895 = vadd.f32 %v1891, %v1894
    %vm1896 = vweird.f32 %v1891
    %v1897 = vsel %vm1896, %v1891, %v1895
    %v1898 = vmul.f32 %v1876, %v1897
    %v1899 = vmul.f32 %v1878, %v1897
    %v1900 = vmul.f32 %v1880, %v1897
    %v1901 = vmul.f32 %v1882, %v1897
    %v1902 = vmul.f32 %v1884, %v1897
    %v1903 = vmul.f32 %v1886, %v1897
    %v1904 = vmul.f32 %v1888, %v1897
    %v1905 = vmul.f32 %v1890, %v1897
    %v1906 = vsub.f32 %v1851, %v1898
    %v1907 = vsub.f32 %v1854, %v1899
    %v1908 = vsub.f32 %v1857, %v1900
    %v1909 = vsub.f32 %v1860, %v1901
    %v1910 = vsub.f32 %v1863, %v1902
    %v1911 = vsub.f32 %v1866, %v1903
    %v1912 = vsub.f32 %v1869, %v1904
    %v1913 = vsub.f32 %v1872, %v1905
    %v1914 = vsel %vm1874, %v1906, 0.0
    %v1915 = vsel %vm1874, %v1907, 0.0
    %v1916 = vsel %vm1874, %v1908, 0.0
    %v1917 = vsel %vm1874, %v1909, 0.0
    %v1918 = vsel %vm1874, %v1910, 0.0
    %v1919 = vsel %vm1874, %v1911, 0.0
    %v1920 = vsel %vm1874, %v1912, 0.0
    %v1921 = vsel %vm1874, %v1913, 0.0
    %v1922 = vmul.f32 %v1914, %v1914
    %v1923 = vmul.f32 %v1915, %v1915
    %v1924 = vmul.f32 %v1916, %v1916
    %v1925 = vmul.f32 %v1917, %v1917
    %v1926 = vmul.f32 %v1918, %v1918
    %v1927 = vmul.f32 %v1919, %v1919
    %v1928 = vmul.f32 %v1920, %v1920
    %v1929 = vmul.f32 %v1921, %v1921
    %1930 = vadd.xlane.f32.xlu0 %v1922
    %v1931 = vpop.xlane.xlu0 %1930
    %1932 = vadd.xlane.f32.xlu0 %v1923
    %v1933 = vpop.xlane.xlu0 %1932
    %1934 = vadd.xlane.f32.xlu0 %v1924
    %v1935 = vpop.xlane.xlu0 %1934
    %1936 = vadd.xlane.f32.xlu0 %v1925
    %v1937 = vpop.xlane.xlu0 %1936
    %1938 = vadd.xlane.f32.xlu0 %v1926
    %v1939 = vpop.xlane.xlu0 %1938
    %1940 = vadd.xlane.f32.xlu0 %v1927
    %v1941 = vpop.xlane.xlu0 %1940
    %1942 = vadd.xlane.f32.xlu0 %v1928
    %v1943 = vpop.xlane.xlu0 %1942
    %1944 = vadd.xlane.f32.xlu0 %v1929
    %v1945 = vpop.xlane.xlu0 %1944
    %v1946 = vmul.f32 %v1931, %v1897
    %v1947 = vmul.f32 %v1933, %v1897
    %v1948 = vmul.f32 %v1935, %v1897
    %v1949 = vmul.f32 %v1937, %v1897
    %v1950 = vmul.f32 %v1939, %v1897
    %v1951 = vmul.f32 %v1941, %v1897
    %v1952 = vmul.f32 %v1943, %v1897
    %v1953 = vmul.f32 %v1945, %v1897
    %v1954 = vadd.f32 %v1946, 1e-05
    %v1955 = vadd.f32 %v1947, 1e-05
    %v1956 = vadd.f32 %v1948, 1e-05
    %v1957 = vadd.f32 %v1949, 1e-05
    %v1958 = vadd.f32 %v1950, 1e-05
    %v1959 = vadd.f32 %v1951, 1e-05
    %v1960 = vadd.f32 %v1952, 1e-05
    %v1961 = vadd.f32 %v1953, 1e-05
    %v1962 = vrsqrt.pop %v1954
    %v1963 = vmul.f32 %v1962, %v1954
    %v1964 = vmul.f32 %v1963, %v1962
    %v1965 = vmul.f32 0.5, %v1964
    %v1966 = vsub.f32 1.5, %v1965
    %v1967 = vmul.f32 %v1962, %v1966
    %vm1968 = vweird.f32 %v1954
    %vm1969 = vweird.f32 %v1962
    %vm1970 = vmor %vm1968, %vm1969
    %v1971 = vsel %vm1970, %v1962, %v1967
    %v1972 = vrsqrt.pop %v1955
    %v1973 = vmul.f32 %v1972, %v1955
    %v1974 = vmul.f32 %v1973, %v1972
    %v1975 = vmul.f32 0.5, %v1974
    %v1976 = vsub.f32 1.5, %v1975
    %v1977 = vmul.f32 %v1972, %v1976
    %vm1978 = vweird.f32 %v1955
    %vm1979 = vweird.f32 %v1972
    %vm1980 = vmor %vm1978, %vm1979
    %v1981 = vsel %vm1980, %v1972, %v1977
    %v1982 = vrsqrt.pop %v1956
    %v1983 = vmul.f32 %v1982, %v1956
    %v1984 = vmul.f32 %v1983, %v1982
    %v1985 = vmul.f32 0.5, %v1984
    %v1986 = vsub.f32 1.5, %v1985
    %v1987 = vmul.f32 %v1982, %v1986
    %vm1988 = vweird.f32 %v1956
    %vm1989 = vweird.f32 %v1982
    %vm1990 = vmor %vm1988, %vm1989
    %v1991 = vsel %vm1990, %v1982, %v1987
    %v1992 = vrsqrt.pop %v1957
    %v1993 = vmul.f32 %v1992, %v1957
    %v1994 = vmul.f32 %v1993, %v1992
    %v1995 = vmul.f32 0.5, %v1994
    %v1996 = vsub.f32 1.5, %v1995
    %v1997 = vmul.f32 %v1992, %v1996
    %vm1998 = vweird.f32 %v1957
    %vm1999 = vweird.f32 %v1992
    %vm2000 = vmor %vm1998, %vm1999
    %v2001 = vsel %vm2000, %v1992, %v1997
    %v2002 = vrsqrt.pop %v1958
    %v2003 = vmul.f32 %v2002, %v1958
    %v2004 = vmul.f32 %v2003, %v2002
    %v2005 = vmul.f32 0.5, %v2004
    %v2006 = vsub.f32 1.5, %v2005
    %v2007 = vmul.f32 %v2002, %v2006
    %vm2008 = vweird.f32 %v1958
    %vm2009 = vweird.f32 %v2002
    %vm2010 = vmor %vm2008, %vm2009
    %v2011 = vsel %vm2010, %v2002, %v2007
    %v2012 = vrsqrt.pop %v1959
    %v2013 = vmul.f32 %v2012, %v1959
    %v2014 = vmul.f32 %v2013, %v2012
    %v2015 = vmul.f32 0.5, %v2014
    %v2016 = vsub.f32 1.5, %v2015
    %v2017 = vmul.f32 %v2012, %v2016
    %vm2018 = vweird.f32 %v1959
    %vm2019 = vweird.f32 %v2012
    %vm2020 = vmor %vm2018, %vm2019
    %v2021 = vsel %vm2020, %v2012, %v2017
    %v2022 = vrsqrt.pop %v1960
    %v2023 = vmul.f32 %v2022, %v1960
    %v2024 = vmul.f32 %v2023, %v2022
    %v2025 = vmul.f32 0.5, %v2024
    %v2026 = vsub.f32 1.5, %v2025
    %v2027 = vmul.f32 %v2022, %v2026
    %vm2028 = vweird.f32 %v1960
    %vm2029 = vweird.f32 %v2022
    %vm2030 = vmor %vm2028, %vm2029
    %v2031 = vsel %vm2030, %v2022, %v2027
    %v2032 = vrsqrt.pop %v1961
    %v2033 = vmul.f32 %v2032, %v1961
    %v2034 = vmul.f32 %v2033, %v2032
    %v2035 = vmul.f32 0.5, %v2034
    %v2036 = vsub.f32 1.5, %v2035
    %v2037 = vmul.f32 %v2032, %v2036
    %vm2038 = vweird.f32 %v1961
    %vm2039 = vweird.f32 %v2032
    %vm2040 = vmor %vm2038, %vm2039
    %v2041 = vsel %vm2040, %v2032, %v2037
    %v2042 = vmul.f32 %v1914, %v1971
    %v2043 = vmul.f32 %v1915, %v1981
    %v2044 = vmul.f32 %v1916, %v1991
    %v2045 = vmul.f32 %v1917, %v2001
    %v2046 = vmul.f32 %v1918, %v2011
    %v2047 = vmul.f32 %v1919, %v2021
    %v2048 = vmul.f32 %v1920, %v2031
    %v2049 = vmul.f32 %v1921, %v2041
    %v2050 = vld [vmem:[%s12] sm:$0x1]
    %v2052 = vperm.slane %v2050, 0
    %v2054 = vmul.f32 %v2042, %v2052
    %v2055 = vmul.f32 %v2043, %v2052
    %v2056 = vmul.f32 %v2044, %v2052
    %v2057 = vmul.f32 %v2045, %v2052
    %v2058 = vmul.f32 %v2046, %v2052
    %v2059 = vmul.f32 %v2047, %v2052
    %v2060 = vmul.f32 %v2048, %v2052
    %v2061 = vmul.f32 %v2049, %v2052
    %v2062 = vld [vmem:[%s13] sm:$0x1]
    %v2064 = vperm.slane %v2062, 0
    %v2066 = vadd.f32 %v2054, %v2064
    %v2067 = vadd.f32 %v2055, %v2064
    %v2068 = vadd.f32 %v2056, %v2064
    %v2069 = vadd.f32 %v2057, %v2064
    %v2070 = vadd.f32 %v2058, %v2064
    %v2071 = vadd.f32 %v2059, %v2064
    %v2072 = vadd.f32 %v2060, %v2064
    %v2073 = vadd.f32 %v2061, %v2064
    %2074 = vst [vmem:[#allocation2] sm:$0xff] %v2066
    %2075 = vst [vmem:[#allocation2 + $0x8] sm:$0xff] %v2067
    %2076 = vst [vmem:[#allocation2 + $0x10] sm:$0xff] %v2068
    %2077 = vst [vmem:[#allocation2 + $0x18] sm:$0xff] %v2069
    %2078 = vst [vmem:[#allocation2 + $0x20] sm:$0xff] %v2070
    %2079 = vst [vmem:[#allocation2 + $0x28] sm:$0xff] %v2071
    %2080 = vst [vmem:[#allocation2 + $0x30] sm:$0xff] %v2072
    %2081 = vst [vmem:[#allocation2 + $0x38] sm:$0xff] %v2073
    // Predicated region
    $region58: #{tpu_custom_call.1} parent=1 // pred_check
      _
    $region59: #{tpu_custom_call.1} parent=1 // pred_check_branch
      %2083 = sbr.rel (0) target = $region61
    $region60: #{tpu_custom_call.1} parent=1 // pred_region
      %2085 = vsyncadd [#allocation3], 0
      %s2086 = sshll.u32 [#allocation2], 4
      %s2087 = int_to_ptr.vmem [resolvable:$true] %s2086
      %s2088 = sshll.u32 %s14, 4
      %s2089 = int_to_ptr.hbm [resolvable:$true] %s2088
      %2094 = dma.vmem_to_hbm [thread:$0]  %s2087, 1024, %s2089, [#allocation3], 128, 128, 8
    $region61: #{tpu_custom_call.1} parent=1 // pred_fallthru
      _
    // Predicated region
    $region62: #{tpu_custom_call.1} parent=1 // pred_check
      _
    $region63: #{tpu_custom_call.1} parent=1 // pred_check_branch
      %2096 = sbr.rel (0) target = $region65
    $region64: #{tpu_custom_call.1} parent=1 // pred_region
      %2098 = dma.done [#allocation3], 1024
    $region65: #{tpu_custom_call.1} parent=1 // pred_fallthru
      _
    %2099 = vsyncpa [#allocation3], 1

</llo_original>
